<compile_context>
chip_gen: v6e
topology: v6e:2x2x1
jax: 0.10.0
libtpu: 0.0.40
codegen_flags: <defaults>
</compile_context>

<pallas_src>
import functools

import jax
import jax.numpy as jnp
from jax.experimental import pallas as pl
from jax.experimental.pallas import tpu as pltpu


def _round_up(n, m):
    return ((n + m - 1) // m) * m


def _cdiv(a, b):
    return -(-a // b)


def _tpu_info():
    """(vmem_capacity_bytes, num_tensorcores) with conservative fallbacks.

    Defaults are v7x-safe (64 MiB VMEM) and single-core; on v5e/v6e the query
    reports 128 MiB so the budget (and hence batch_tile) grows accordingly.
    """
    vmem_bytes = 64 << 20
    num_cores = 1
    try:
        info = pltpu.get_tpu_info()
        vmem_bytes = int(getattr(info, "vmem_capacity_bytes", vmem_bytes))
        for name in ("num_cores", "num_tensorcores", "tensor_cores_per_chip",
                     "cores_per_chip"):
            v = getattr(info, name, None)
            if v:
                num_cores = int(v)
                break
    except Exception:
        pass  # interpret mode / CPU: keep conservative defaults
    return max(vmem_bytes, 16 << 20), max(num_cores, 1)


# --------------------------------------------------------------------------- #
# Kernel
# --------------------------------------------------------------------------- #
def _mlp_kernel(num_linear, *refs):
    """Fused MLP body.

    refs: x_ref, noise_ref, w0x, w0n, b0, [w_i, b_i]..., w_last, b_last, out_ref
    """
    x_ref, noise_ref = refs[0], refs[1]
    out_ref = refs[-1]
    params = refs[2:-1]
    w0x_ref, w0n_ref, b0_ref = params[0], params[1], params[2]
    compute_dtype = w0x_ref.dtype

    # Epilogue (bias + ReLU) dtype: bf16 when the weights are sub-32-bit
    # (v6e/v7x have bf16 VALUs -> half the VPU work and half the live-activation
    # VMEM); f32 weights keep a full f32 epilogue (also correct on v5e).
    epi_dtype = (compute_dtype
                 if jnp.dtype(compute_dtype).itemsize < 4 else jnp.float32)

    x = x_ref[...].astype(compute_dtype)
    noise = noise_ref[...].astype(compute_dtype)

    # Layer 0: concat(x, noise) @ W0 + b0 as a split matmul (concat eliminated).
    h = (jnp.dot(x, w0x_ref[...], preferred_element_type=jnp.float32)
         + jnp.dot(noise, w0n_ref[...], preferred_element_type=jnp.float32))
    h = h.astype(epi_dtype) + b0_ref[...].astype(epi_dtype)
    h = jnp.maximum(h, 0.0)  # layer 0 is always a hidden (Linear+ReLU) block

    idx = 3
    for layer in range(1, num_linear):
        w_ref, b_ref = params[idx], params[idx + 1]
        idx += 2
        acc = jnp.dot(h.astype(w_ref.dtype), w_ref[...],
                      preferred_element_type=jnp.float32)
        if layer < num_linear - 1:           # hidden layer: bias + ReLU
            acc = acc.astype(epi_dtype) + b_ref[...].astype(epi_dtype)
            h = jnp.maximum(acc, 0.0)
        else:                                # final Linear: bias only, f32
            h = acc + b_ref[...].astype(jnp.float32)

    out_ref[...] = h.astype(out_ref.dtype)


# --------------------------------------------------------------------------- #
# Parameter preparation (done ONCE, not per forward)
# --------------------------------------------------------------------------- #
def prepare_params(weights, biases, in_features, noise_features, *,
                   lane_pad_output=True):
    """Hoist per-call weight reshuffling out of the forward path.

    * Splits W0 so concat(x, noise) @ W0 == x @ W0x + noise @ W0n.
    * Optionally zero-pads the final Linear to a multiple of 128 output columns
      (lane-dense unmasked stores; set lane_pad_output=False on v5e when
      out_features << 128 and HBM writeback dominates).
    """
    num_linear = len(weights)
    assert num_linear >= 2, "module implies num_layers >= 1"
    assert weights[0].shape[0] == in_features + noise_features
    out_features = int(weights[-1].shape[1])

    w0x = jnp.asarray(weights[0][:in_features])
    w0n = jnp.asarray(weights[0][in_features:])
    w_last = jnp.asarray(weights[-1])
    b_last = jnp.asarray(biases[-1])

    out_pad = _round_up(out_features, 128) if lane_pad_output else out_features
    if out_pad != out_features:
        w_last = jnp.pad(w_last, ((0, 0), (0, out_pad - out_features)))
        b_last = jnp.pad(b_last, ((0, 0), (0, out_pad - out_features)))

    params = [w0x, w0n, jnp.asarray(biases[0])]
    for i in range(1, num_linear - 1):
        params += [jnp.asarray(weights[i]), jnp.asarray(biases[i])]
    params += [w_last, b_last]

    weight_elems = (int(w0x.size) + int(w0n.size)
                    + sum(int(jnp.asarray(w).size) for w in weights[1:-1])
                    + int(w_last.size))

    return dict(
        params=tuple(params),
        num_linear=num_linear,
        in_features=int(in_features),
        noise_features=int(noise_features),
        out_features=out_features,
        out_pad=int(out_pad),
        hidden_max=int(max(w.shape[1] for w in weights[:-1])),
        compute_dtype=jnp.dtype(weights[0].dtype),
        weight_elems=weight_elems,
    )


# --------------------------------------------------------------------------- #
# Forward wrapper
# --------------------------------------------------------------------------- #
def _per_row_bytes(prepared, x_itemsize, out_itemsize):
    """Rough per-batch-row VMEM footprint (double-buffered I/O tiles + live
    activations + f32 output accumulator)."""
    act_itemsize = min(int(prepared["compute_dtype"].itemsize), 4)
    io = (2 * (prepared["in_features"] + prepared["noise_features"]) * x_itemsize
          + 2 * prepared["out_pad"] * out_itemsize)
    act = 2 * prepared["hidden_max"] * act_itemsize + prepared["out_pad"] * 4
    return io + act


def mlp_forward(x, noise, prepared, *, batch_tile=None, param_single_buffer=True):
    """Run the fused MLP kernel on `x` with explicit Gaussian `noise`."""
    B, in_features = x.shape
    assert in_features == prepared["in_features"]
    assert noise.shape == (B, prepared["noise_features"])

    params = prepared["params"]
    num_linear = prepared["num_linear"]
    out_features = prepared["out_features"]
    out_pad = prepared["out_pad"]
    out_dtype = x.dtype

    # ---- VMEM budget & tiling -------------------------------------------- #
    vmem_bytes, num_cores = _tpu_info()
    budget = min(vmem_bytes * 3 // 4, 100 << 20)   # never assume 128 MiB

    compute_itemsize = int(prepared["compute_dtype"].itemsize)
    row_gran = {4: 8, 2: 16, 1: 32}.get(compute_itemsize, 8)

    param_bytes = sum(int(p.size) * p.dtype.itemsize for p in params)
    buffer_count = 1 if param_single_buffer else 2
    per_row = _per_row_bytes(prepared, x.dtype.itemsize,
                             jnp.dtype(out_dtype).itemsize)
    avail = budget - param_bytes * buffer_count
    if avail < per_row * row_gran:
        # TODO(synk): tile hidden-layer weights along the output (N) axis /
        # pltpu.emit_pipeline over weight slabs when the full parameter set
        # does not fit in VMEM.
        raise ValueError(
            f"parameters ({param_bytes} B x {buffer_count} buffers) exceed the "
            f"{budget} B VMEM budget; weight-slab pipelining not implemented")

    if batch_tile is None:
        batch_tile = min((int(avail // per_row) // row_gran) * row_gran,
                         1024, _round_up(B, row_gran))
        batch_tile = max(batch_tile, row_gran)
        if num_cores > 1:
            # Give every TensorCore at least one tile of work.
            per_core = _round_up(_cdiv(B, num_cores), row_gran)
            batch_tile = max(row_gran, min(batch_tile, per_core))
    else:
        batch_tile = max(row_gran, _round_up(int(batch_tile), row_gran))

    n_tiles = _cdiv(B, batch_tile)
    if num_cores > 1 and n_tiles > 1:
        # Balanced megacore split: equal tile counts per core.
        n_tiles = _round_up(n_tiles, num_cores)
    padded_B = n_tiles * batch_tile
    if padded_B != B:
        x = jnp.pad(x, ((0, padded_B - B), (0, 0)))
        noise = jnp.pad(noise, ((0, padded_B - B), (0, 0)))

    # ---- specs ------------------------------------------------------------ #
    row_map = lambda i: (i, 0)
    const_map = lambda i: (0, 0)

    def build_specs(single_buffer):
        pm = {}
        if single_buffer:
            # Grid-invariant weights: block index never changes, so the default
            # double-buffering is pure 2x VMEM waste -> single buffer.
            pm = dict(pipeline_mode=pl.Buffered(1))
        in_specs = [
            pl.BlockSpec((batch_tile, in_features), row_map),
            pl.BlockSpec((batch_tile, prepared["noise_features"]), row_map),
        ]
        in_specs += [pl.BlockSpec(p.shape, const_map, **pm) for p in params]
        out_spec = pl.BlockSpec((batch_tile, out_pad), row_map)
        return in_specs, out_spec

    # Advisory cost estimate so XLA schedules surrounding ops sensibly.
    io_bytes = (int(x.size) * x.dtype.itemsize
                + int(noise.size) * noise.dtype.itemsize
                + padded_B * out_pad * jnp.dtype(out_dtype).itemsize)
    cost = pl.CostEstimate(
        flops=int(2 * padded_B * prepared["weight_elems"]),
        transcendentals=0,
        bytes_accessed=int(param_bytes + io_bytes),
    )

    kernel = functools.partial(_mlp_kernel, num_linear)

    def run(single_buffer):
        in_specs, out_spec = build_specs(single_buffer)
        grid_spec = pltpu.PrefetchScalarGridSpec(
            num_scalar_prefetch=0,
            grid=(n_tiles,),
            in_specs=in_specs,
            out_specs=out_spec,
        )
        return pl.pallas_call(
            kernel,
            out_shape=jax.ShapeDtypeStruct((padded_B, out_pad), out_dtype),
            grid_spec=grid_spec,
            compiler_params=pltpu.CompilerParams(
                dimension_semantics=("parallel",),
                vmem_limit_bytes=int(budget),
            ),
            cost_estimate=cost,
        )(x, noise, *params)

    try:
        out = run(param_single_buffer)
    except Exception:
        if not param_single_buffer:
            raise
        out = run(False)  # fallback: Buffered(1) unsupported on this path

    # Strip batch padding and the lane padding of the final layer.
    return out[:B, :out_features]


def model_forward(x, noise_seed, prepared, *, batch_tile=None):
    """Equivalent of _Model.forward: draw Gaussian noise for the batch, then run
    the fused MLP (the concat is folded into the split layer-0 matmul)."""
    # TODO(synk): torch.randn's device-side RNG has no portable Pallas
    # equivalent (pltpu.prng_seed has no CPU/interpret lowering), so the noise
    # is drawn with jax.random in the wrapper and streamed into the kernel.
    key = (noise_seed if not isinstance(noise_seed, int)
           else jax.random.PRNGKey(noise_seed))
    noise = jax.random.normal(
        key, (x.shape[0], prepared["noise_features"]), dtype=jnp.float32
    ).astype(x.dtype)
    return mlp_forward(x, noise, prepared, batch_tile=batch_tile)


# --------------------------------------------------------------------------- #
# Init + reference
# --------------------------------------------------------------------------- #
def init_params(key, num_layers, in_features, noise_features, hidden_features,
                out_features, dtype=jnp.float32):
    """Deterministic init matching PyTorch nn.Linear default U(-1/sqrt(fan_in),+).
    Use dtype=jnp.bfloat16 on v6e/v7x to halve parameter/activation traffic
    (matmuls still accumulate in f32 inside the kernel)."""
    dim_list = ([in_features + noise_features]
                + [hidden_features] * num_layers + [out_features])
    weights, biases = [], []
    for fan_in, fan_out in zip(dim_list[:-1], dim_list[1:]):
        key, kw, kb = jax.random.split(key, 3)
        bound = 1.0 / float(fan_in) ** 0.5
        w = jax.random.uniform(kw, (fan_in, fan_out), dtype=dtype,
                               minval=-bound, maxval=bound)
        b = jax.random.uniform(kb, (1, fan_out), dtype=dtype,
                               minval=-bound, maxval=bound)
        weights.append(w)
        biases.append(b)
    return weights, biases


def _reference_mlp(x_cat, weights, biases):
    h = x_cat
    for i, (w, b) in enumerate(zip(weights, biases)):
        h = jnp.dot(h, w, precision=jax.lax.Precision.HIGHEST) + b
        if i < len(weights) - 1:
            h = jnp.maximum(h, 0.0)
    return h


if __name__ == "__main__":
    # Small, deterministic config consistent with the module's __init__.
    num_layers = 2
    in_features = 8
    noise_features = 8
    hidden_features = 32
    out_features = 4
    batch = 64

    key = jax.random.PRNGKey(0)
    k_x, k_noise, k_params = jax.random.split(key, 3)

    x = jax.random.normal(k_x, (batch, in_features), dtype=jnp.float32)
    weights, biases = init_params(k_params, num_layers, in_features,
                                  noise_features, hidden_features, out_features)
    prepared = prepare_params(weights, biases, in_features, noise_features)

    # --- 1) Exact correctness check: known-noise path vs pure-JAX reference ---
    noise = jax.random.normal(k_noise, (batch, noise_features), dtype=x.dtype)
    out_ext = jax.block_until_ready(mlp_forward(x, noise, prepared))
    ref = _reference_mlp(jnp.concatenate([x, noise], axis=1), weights, biases)
    assert out_ext.shape == (batch, out_features)
    max_err = float(jnp.max(jnp.abs(out_ext - ref)))
    assert jnp.allclose(out_ext, ref, atol=5e-4, rtol=5e-4), max_err

    # --- 1b) Ragged batch (exercises batch padding + slice-back) ---
    xr, nr = x[:50], noise[:50]
    out_r = jax.block_until_ready(mlp_forward(xr, nr, prepared))
    ref_r = _reference_mlp(jnp.concatenate([xr, nr], axis=1), weights, biases)
    assert out_r.shape == (50, out_features)
    assert jnp.allclose(out_r, ref_r, atol=5e-4, rtol=5e-4)

    # --- 2) Module-equivalent path: seed -> Gaussian noise -> fused MLP ---
    out = jax.block_until_ready(model_forward(x, 1234, prepared))
    assert out.shape == (batch, out_features)
    assert bool(jnp.all(jnp.isfinite(out)))

    print("KERNEL_OK")
</pallas_src>

<mosaic_0001>
module attributes {stable_mosaic.version = 11 : i64} {
  func.func @_mlp_kernel(%arg0: i32, %arg1: memref<64x8xf32, #tpu.memory_space<vmem>>, %arg2: memref<64x8xf32, #tpu.memory_space<vmem>>, %arg3: memref<8x32xf32, #tpu.memory_space<vmem>>, %arg4: memref<8x32xf32, #tpu.memory_space<vmem>>, %arg5: memref<1x32xf32, #tpu.memory_space<vmem>>, %arg6: memref<32x32xf32, #tpu.memory_space<vmem>>, %arg7: memref<1x32xf32, #tpu.memory_space<vmem>>, %arg8: memref<32x128xf32, #tpu.memory_space<vmem>>, %arg9: memref<1x128xf32, #tpu.memory_space<vmem>>, %arg10: memref<64x128xf32, #tpu.memory_space<vmem>>) attributes {dimension_semantics = [#tpu.dimension_semantics<parallel>], iteration_bounds = array<i64: 1>, scalar_prefetch = 0 : i64, scratch_operands = 0 : i64, tpu.core_type = #tpu.core_type<tc>, window_params = [{transform_indices = @transform_0, window_bounds = array<i64: 64, 8>}, {transform_indices = @transform_1, window_bounds = array<i64: 64, 8>}, {pipeline_mode = #tpu.pipeline_mode<synchronous>, transform_indices = @transform_2, window_bounds = array<i64: 8, 32>}, {pipeline_mode = #tpu.pipeline_mode<synchronous>, transform_indices = @transform_3, window_bounds = array<i64: 8, 32>}, {pipeline_mode = #tpu.pipeline_mode<synchronous>, transform_indices = @transform_4, window_bounds = array<i64: 1, 32>}, {pipeline_mode = #tpu.pipeline_mode<synchronous>, transform_indices = @transform_5, window_bounds = array<i64: 32, 32>}, {pipeline_mode = #tpu.pipeline_mode<synchronous>, transform_indices = @transform_6, window_bounds = array<i64: 1, 32>}, {pipeline_mode = #tpu.pipeline_mode<synchronous>, transform_indices = @transform_7, window_bounds = array<i64: 32, 128>}, {pipeline_mode = #tpu.pipeline_mode<synchronous>, transform_indices = @transform_8, window_bounds = array<i64: 1, 128>}, {transform_indices = @transform_9, window_bounds = array<i64: 64, 128>}]} {
    %c0 = arith.constant 0 : index
    %c0_0 = arith.constant 0 : index
    %0 = vector.load %arg1[%c0, %c0_0] : memref<64x8xf32, #tpu.memory_space<vmem>>, vector<64x8xf32>
    %c0_1 = arith.constant 0 : index
    %c0_2 = arith.constant 0 : index
    %1 = vector.load %arg2[%c0_1, %c0_2] : memref<64x8xf32, #tpu.memory_space<vmem>>, vector<64x8xf32>
    %c0_3 = arith.constant 0 : index
    %c0_4 = arith.constant 0 : index
    %2 = vector.load %arg3[%c0_3, %c0_4] : memref<8x32xf32, #tpu.memory_space<vmem>>, vector<8x32xf32>
    %cst = arith.constant dense<0.000000e+00> : vector<64x32xf32>
    %3 = tpu.matmul %0, %2, %cst {dimension_numbers = #tpu.dot_dimension_numbers<[1], [0], [0], [1], [0, 0, 1, 1], [], []>} : vector<64x8xf32>, vector<8x32xf32>, vector<64x32xf32> -> vector<64x32xf32>
    %c0_5 = arith.constant 0 : index
    %c0_6 = arith.constant 0 : index
    %4 = vector.load %arg4[%c0_5, %c0_6] : memref<8x32xf32, #tpu.memory_space<vmem>>, vector<8x32xf32>
    %cst_7 = arith.constant dense<0.000000e+00> : vector<64x32xf32>
    %5 = tpu.matmul %1, %4, %cst_7 {dimension_numbers = #tpu.dot_dimension_numbers<[1], [0], [0], [1], [0, 0, 1, 1], [], []>} : vector<64x8xf32>, vector<8x32xf32>, vector<64x32xf32> -> vector<64x32xf32>
    %6 = arith.addf %3, %5 : vector<64x32xf32>
    %c0_8 = arith.constant 0 : index
    %c0_9 = arith.constant 0 : index
    %7 = vector.load %arg5[%c0_8, %c0_9] : memref<1x32xf32, #tpu.memory_space<vmem>>, vector<1x32xf32>
    %8 = vector.broadcast %7 : vector<1x32xf32> to vector<64x32xf32>
    %9 = arith.addf %6, %8 : vector<64x32xf32>
    %cst_10 = arith.constant 0.000000e+00 : f32
    %10 = vector.broadcast %cst_10 : f32 to vector<64x32xf32>
    %11 = arith.maximumf %9, %10 : vector<64x32xf32>
    %c0_11 = arith.constant 0 : index
    %c0_12 = arith.constant 0 : index
    %12 = vector.load %arg6[%c0_11, %c0_12] : memref<32x32xf32, #tpu.memory_space<vmem>>, vector<32x32xf32>
    %cst_13 = arith.constant dense<0.000000e+00> : vector<64x32xf32>
    %13 = tpu.matmul %11, %12, %cst_13 {dimension_numbers = #tpu.dot_dimension_numbers<[1], [0], [0], [1], [0, 0, 1, 1], [], []>} : vector<64x32xf32>, vector<32x32xf32>, vector<64x32xf32> -> vector<64x32xf32>
    %c0_14 = arith.constant 0 : index
    %c0_15 = arith.constant 0 : index
    %14 = vector.load %arg7[%c0_14, %c0_15] : memref<1x32xf32, #tpu.memory_space<vmem>>, vector<1x32xf32>
    %15 = vector.broadcast %14 : vector<1x32xf32> to vector<64x32xf32>
    %16 = arith.addf %13, %15 : vector<64x32xf32>
    %cst_16 = arith.constant 0.000000e+00 : f32
    %17 = vector.broadcast %cst_16 : f32 to vector<64x32xf32>
    %18 = arith.maximumf %16, %17 : vector<64x32xf32>
    %c0_17 = arith.constant 0 : index
    %c0_18 = arith.constant 0 : index
    %19 = vector.load %arg8[%c0_17, %c0_18] : memref<32x128xf32, #tpu.memory_space<vmem>>, vector<32x128xf32>
    %cst_19 = arith.constant dense<0.000000e+00> : vector<64x128xf32>
    %20 = tpu.matmul %18, %19, %cst_19 {dimension_numbers = #tpu.dot_dimension_numbers<[1], [0], [0], [1], [0, 0, 1, 1], [], []>} : vector<64x32xf32>, vector<32x128xf32>, vector<64x128xf32> -> vector<64x128xf32>
    %c0_20 = arith.constant 0 : index
    %c0_21 = arith.constant 0 : index
    %21 = vector.load %arg9[%c0_20, %c0_21] : memref<1x128xf32, #tpu.memory_space<vmem>>, vector<1x128xf32>
    %22 = vector.broadcast %21 : vector<1x128xf32> to vector<64x128xf32>
    %23 = arith.addf %20, %22 : vector<64x128xf32>
    %c0_22 = arith.constant 0 : index
    %c0_23 = arith.constant 0 : index
    %24 = vector.load %arg10[%c0_22, %c0_23] : memref<64x128xf32, #tpu.memory_space<vmem>>, vector<64x128xf32>
    tpu.vector_store %arg10[%c0_22, %c0_23], %23 {strides = array<i32>} : memref<64x128xf32, #tpu.memory_space<vmem>>, vector<64x128xf32>,
    return
  }
  func.func @transform_0(%arg0: i32) -> (i32, i32) {
    %c0_i32 = arith.constant 0 : i32
    %c0_i32_0 = arith.constant 0 : i32
    return %arg0, %c0_i32 : i32, i32
  }
  func.func @transform_1(%arg0: i32) -> (i32, i32) {
    %c0_i32 = arith.constant 0 : i32
    %c0_i32_0 = arith.constant 0 : i32
    return %arg0, %c0_i32 : i32, i32
  }
  func.func @transform_2(%arg0: i32) -> (i32, i32) {
    %c0_i32 = arith.constant 0 : i32
    %c0_i32_0 = arith.constant 0 : i32
    %c0_i32_1 = arith.constant 0 : i32
    return %c0_i32, %c0_i32_0 : i32, i32
  }
  func.func @transform_3(%arg0: i32) -> (i32, i32) {
    %c0_i32 = arith.constant 0 : i32
    %c0_i32_0 = arith.constant 0 : i32
    %c0_i32_1 = arith.constant 0 : i32
    return %c0_i32, %c0_i32_0 : i32, i32
  }
  func.func @transform_4(%arg0: i32) -> (i32, i32) {
    %c0_i32 = arith.constant 0 : i32
    %c0_i32_0 = arith.constant 0 : i32
    %c0_i32_1 = arith.constant 0 : i32
    return %c0_i32, %c0_i32_0 : i32, i32
  }
  func.func @transform_5(%arg0: i32) -> (i32, i32) {
    %c0_i32 = arith.constant 0 : i32
    %c0_i32_0 = arith.constant 0 : i32
    %c0_i32_1 = arith.constant 0 : i32
    return %c0_i32, %c0_i32_0 : i32, i32
  }
  func.func @transform_6(%arg0: i32) -> (i32, i32) {
    %c0_i32 = arith.constant 0 : i32
    %c0_i32_0 = arith.constant 0 : i32
    %c0_i32_1 = arith.constant 0 : i32
    return %c0_i32, %c0_i32_0 : i32, i32
  }
  func.func @transform_7(%arg0: i32) -> (i32, i32) {
    %c0_i32 = arith.constant 0 : i32
    %c0_i32_0 = arith.constant 0 : i32
    %c0_i32_1 = arith.constant 0 : i32
    return %c0_i32, %c0_i32_0 : i32, i32
  }
  func.func @transform_8(%arg0: i32) -> (i32, i32) {
    %c0_i32 = arith.constant 0 : i32
    %c0_i32_0 = arith.constant 0 : i32
    %c0_i32_1 = arith.constant 0 : i32
    return %c0_i32, %c0_i32_0 : i32, i32
  }
  func.func @transform_9(%arg0: i32) -> (i32, i32) {
    %c0_i32 = arith.constant 0 : i32
    %c0_i32_0 = arith.constant 0 : i32
    return %arg0, %c0_i32 : i32, i32
  }
}

module attributes {stable_mosaic.version = 11 : i64} {
  func.func @_mlp_kernel(%arg0: i32, %arg1: memref<64x8xf32, #tpu.memory_space<vmem>>, %arg2: memref<64x8xf32, #tpu.memory_space<vmem>>, %arg3: memref<8x32xf32, #tpu.memory_space<vmem>>, %arg4: memref<8x32xf32, #tpu.memory_space<vmem>>, %arg5: memref<1x32xf32, #tpu.memory_space<vmem>>, %arg6: memref<32x32xf32, #tpu.memory_space<vmem>>, %arg7: memref<1x32xf32, #tpu.memory_space<vmem>>, %arg8: memref<32x128xf32, #tpu.memory_space<vmem>>, %arg9: memref<1x128xf32, #tpu.memory_space<vmem>>, %arg10: memref<64x128xf32, #tpu.memory_space<vmem>>) attributes {dimension_semantics = [#tpu.dimension_semantics<parallel>], iteration_bounds = array<i64: 1>, scalar_prefetch = 0 : i64, scratch_operands = 0 : i64, tpu.core_type = #tpu.core_type<tc>, window_params = [{transform_indices = @transform_0, window_bounds = array<i64: 64, 8>}, {transform_indices = @transform_1, window_bounds = array<i64: 64, 8>}, {pipeline_mode = #tpu.pipeline_mode<synchronous>, transform_indices = @transform_2, window_bounds = array<i64: 8, 32>}, {pipeline_mode = #tpu.pipeline_mode<synchronous>, transform_indices = @transform_3, window_bounds = array<i64: 8, 32>}, {pipeline_mode = #tpu.pipeline_mode<synchronous>, transform_indices = @transform_4, window_bounds = array<i64: 1, 32>}, {pipeline_mode = #tpu.pipeline_mode<synchronous>, transform_indices = @transform_5, window_bounds = array<i64: 32, 32>}, {pipeline_mode = #tpu.pipeline_mode<synchronous>, transform_indices = @transform_6, window_bounds = array<i64: 1, 32>}, {pipeline_mode = #tpu.pipeline_mode<synchronous>, transform_indices = @transform_7, window_bounds = array<i64: 32, 128>}, {pipeline_mode = #tpu.pipeline_mode<synchronous>, transform_indices = @transform_8, window_bounds = array<i64: 1, 128>}, {transform_indices = @transform_9, window_bounds = array<i64: 64, 128>}]} {
    %c0 = arith.constant 0 : index
    %c0_0 = arith.constant 0 : index
    %0 = vector.load %arg1[%c0, %c0_0] : memref<64x8xf32, #tpu.memory_space<vmem>>, vector<64x8xf32>
    %c0_1 = arith.constant 0 : index
    %c0_2 = arith.constant 0 : index
    %1 = vector.load %arg2[%c0_1, %c0_2] : memref<64x8xf32, #tpu.memory_space<vmem>>, vector<64x8xf32>
    %c0_3 = arith.constant 0 : index
    %c0_4 = arith.constant 0 : index
    %2 = vector.load %arg3[%c0_3, %c0_4] : memref<8x32xf32, #tpu.memory_space<vmem>>, vector<8x32xf32>
    %cst = arith.constant dense<0.000000e+00> : vector<64x32xf32>
    %3 = tpu.matmul %0, %2, %cst {dimension_numbers = #tpu.dot_dimension_numbers<[1], [0], [0], [1], [0, 0, 1, 1], [], []>} : vector<64x8xf32>, vector<8x32xf32>, vector<64x32xf32> -> vector<64x32xf32>
    %c0_5 = arith.constant 0 : index
    %c0_6 = arith.constant 0 : index
    %4 = vector.load %arg4[%c0_5, %c0_6] : memref<8x32xf32, #tpu.memory_space<vmem>>, vector<8x32xf32>
    %cst_7 = arith.constant dense<0.000000e+00> : vector<64x32xf32>
    %5 = tpu.matmul %1, %4, %cst_7 {dimension_numbers = #tpu.dot_dimension_numbers<[1], [0], [0], [1], [0, 0, 1, 1], [], []>} : vector<64x8xf32>, vector<8x32xf32>, vector<64x32xf32> -> vector<64x32xf32>
    %6 = arith.addf %3, %5 : vector<64x32xf32>
    %c0_8 = arith.constant 0 : index
    %c0_9 = arith.constant 0 : index
    %7 = vector.load %arg5[%c0_8, %c0_9] : memref<1x32xf32, #tpu.memory_space<vmem>>, vector<1x32xf32>
    %8 = vector.broadcast %7 : vector<1x32xf32> to vector<64x32xf32>
    %9 = arith.addf %6, %8 : vector<64x32xf32>
    %cst_10 = arith.constant 0.000000e+00 : f32
    %10 = vector.broadcast %cst_10 : f32 to vector<64x32xf32>
    %11 = arith.maximumf %9, %10 : vector<64x32xf32>
    %c0_11 = arith.constant 0 : index
    %c0_12 = arith.constant 0 : index
    %12 = vector.load %arg6[%c0_11, %c0_12] : memref<32x32xf32, #tpu.memory_space<vmem>>, vector<32x32xf32>
    %cst_13 = arith.constant dense<0.000000e+00> : vector<64x32xf32>
    %13 = tpu.matmul %11, %12, %cst_13 {dimension_numbers = #tpu.dot_dimension_numbers<[1], [0], [0], [1], [0, 0, 1, 1], [], []>} : vector<64x32xf32>, vector<32x32xf32>, vector<64x32xf32> -> vector<64x32xf32>
    %c0_14 = arith.constant 0 : index
    %c0_15 = arith.constant 0 : index
    %14 = vector.load %arg7[%c0_14, %c0_15] : memref<1x32xf32, #tpu.memory_space<vmem>>, vector<1x32xf32>
    %15 = vector.broadcast %14 : vector<1x32xf32> to vector<64x32xf32>
    %16 = arith.addf %13, %15 : vector<64x32xf32>
    %cst_16 = arith.constant 0.000000e+00 : f32
    %17 = vector.broadcast %cst_16 : f32 to vector<64x32xf32>
    %18 = arith.maximumf %16, %17 : vector<64x32xf32>
    %c0_17 = arith.constant 0 : index
    %c0_18 = arith.constant 0 : index
    %19 = vector.load %arg8[%c0_17, %c0_18] : memref<32x128xf32, #tpu.memory_space<vmem>>, vector<32x128xf32>
    %cst_19 = arith.constant dense<0.000000e+00> : vector<64x128xf32>
    %20 = tpu.matmul %18, %19, %cst_19 {dimension_numbers = #tpu.dot_dimension_numbers<[1], [0], [0], [1], [0, 0, 1, 1], [], []>} : vector<64x32xf32>, vector<32x128xf32>, vector<64x128xf32> -> vector<64x128xf32>
    %c0_20 = arith.constant 0 : index
    %c0_21 = arith.constant 0 : index
    %21 = vector.load %arg9[%c0_20, %c0_21] : memref<1x128xf32, #tpu.memory_space<vmem>>, vector<1x128xf32>
    %22 = vector.broadcast %21 : vector<1x128xf32> to vector<64x128xf32>
    %23 = arith.addf %20, %22 : vector<64x128xf32>
    %c0_22 = arith.constant 0 : index
    %c0_23 = arith.constant 0 : index
    %24 = vector.load %arg10[%c0_22, %c0_23] : memref<64x128xf32, #tpu.memory_space<vmem>>, vector<64x128xf32>
    tpu.vector_store %arg10[%c0_22, %c0_23], %23 {strides = array<i32>} : memref<64x128xf32, #tpu.memory_space<vmem>>, vector<64x128xf32>,
    return
  }
  func.func @transform_0(%arg0: i32) -> (i32, i32) {
    %c0_i32 = arith.constant 0 : i32
    %c0_i32_0 = arith.constant 0 : i32
    return %arg0, %c0_i32 : i32, i32
  }
  func.func @transform_1(%arg0: i32) -> (i32, i32) {
    %c0_i32 = arith.constant 0 : i32
    %c0_i32_0 = arith.constant 0 : i32
    return %arg0, %c0_i32 : i32, i32
  }
  func.func @transform_2(%arg0: i32) -> (i32, i32) {
    %c0_i32 = arith.constant 0 : i32
    %c0_i32_0 = arith.constant 0 : i32
    %c0_i32_1 = arith.constant 0 : i32
    return %c0_i32, %c0_i32_0 : i32, i32
  }
  func.func @transform_3(%arg0: i32) -> (i32, i32) {
    %c0_i32 = arith.constant 0 : i32
    %c0_i32_0 = arith.constant 0 : i32
    %c0_i32_1 = arith.constant 0 : i32
    return %c0_i32, %c0_i32_0 : i32, i32
  }
  func.func @transform_4(%arg0: i32) -> (i32, i32) {
    %c0_i32 = arith.constant 0 : i32
    %c0_i32_0 = arith.constant 0 : i32
    %c0_i32_1 = arith.constant 0 : i32
    return %c0_i32, %c0_i32_0 : i32, i32
  }
  func.func @transform_5(%arg0: i32) -> (i32, i32) {
    %c0_i32 = arith.constant 0 : i32
    %c0_i32_0 = arith.constant 0 : i32
    %c0_i32_1 = arith.constant 0 : i32
    return %c0_i32, %c0_i32_0 : i32, i32
  }
  func.func @transform_6(%arg0: i32) -> (i32, i32) {
    %c0_i32 = arith.constant 0 : i32
    %c0_i32_0 = arith.constant 0 : i32
    %c0_i32_1 = arith.constant 0 : i32
    return %c0_i32, %c0_i32_0 : i32, i32
  }
  func.func @transform_7(%arg0: i32) -> (i32, i32) {
    %c0_i32 = arith.constant 0 : i32
    %c0_i32_0 = arith.constant 0 : i32
    %c0_i32_1 = arith.constant 0 : i32
    return %c0_i32, %c0_i32_0 : i32, i32
  }
  func.func @transform_8(%arg0: i32) -> (i32, i32) {
    %c0_i32 = arith.constant 0 : i32
    %c0_i32_0 = arith.constant 0 : i32
    %c0_i32_1 = arith.constant 0 : i32
    return %c0_i32, %c0_i32_0 : i32, i32
  }
  func.func @transform_9(%arg0: i32) -> (i32, i32) {
    %c0_i32 = arith.constant 0 : i32
    %c0_i32_0 = arith.constant 0 : i32
    return %arg0, %c0_i32 : i32, i32
  }
}

</mosaic_0001>

<llo_original>
// kernel: tpu_custom_call.1
$region0: #{tpu_custom_call.1}
  #allocation0 [shape = 'u32[]', space=smem, size = 0x4, offset = 0x4, fixed_abs, tag = 'smem constant byte address 0x4 - core index']
  #allocation1 [shape = 'u32[144,128]{1,0:T(1,128)}', space=vmem, size = 0x12000, scoped, tag = 'internal scratch']
  %s0 = inlined_call_operand.vmem [shape: f32[64,8], index: 0, kind: input, shape index: {}]
  %s1 = inlined_call_operand.vmem [shape: f32[64,8], index: 1, kind: input, shape index: {}]
  %s2 = inlined_call_operand.vmem [shape: f32[8,32], index: 2, kind: input, shape index: {}]
  %s3 = inlined_call_operand.vmem [shape: f32[8,32], index: 3, kind: input, shape index: {}]
  %s4 = inlined_call_operand.vmem [shape: f32[1,32], index: 4, kind: input, shape index: {}]
  %s5 = inlined_call_operand.vmem [shape: f32[32,32], index: 5, kind: input, shape index: {}]
  %s6 = inlined_call_operand.vmem [shape: f32[1,32], index: 6, kind: input, shape index: {}]
  %s7 = inlined_call_operand.vmem [shape: f32[32,128], index: 7, kind: input, shape index: {}]
  %s8 = inlined_call_operand.vmem [shape: f32[1,128], index: 8, kind: input, shape index: {}]
  %s9 = inlined_call_operand.hbm [shape: f32[64,128], index: 9, kind: output, shape index: {}]
  %s10 = sld [smem:[#allocation0]]
  $region46: #{tpu_custom_call.1} parent=0
    _
  %s12 = ssub.s32 1, %s10
  %s13 = scalar_select 0, %s12, %s10
  $region1: #{tpu_custom_call.1} parent=0
    #allocation2 [shape = 'u8[32768]{0}', space=vmem, size = 0x8000, scoped, tag = 'output window, operand 0, single buffered']
    #allocation3 [shape = 's32[1]{0}', space=sflag, size = 0x4, scoped, tag = 'scoped memory for tpu_custom_call.1']
    %14 = vsyncpa [#allocation3], 0
    // Predicated region
    $region2: #{tpu_custom_call.1} parent=1 // pred_check
      _
    $region3: #{tpu_custom_call.1} parent=1 // pred_check_branch
      %16 = sbr.rel (0) target = $region5
    $region4: #{tpu_custom_call.1} parent=1 // pred_region
      _
    $region5: #{tpu_custom_call.1} parent=1 // pred_fallthru
      _
    // Predicated region
    $region6: #{tpu_custom_call.1} parent=1 // pred_check
      _
    $region7: #{tpu_custom_call.1} parent=1 // pred_check_branch
      %18 = sbr.rel (0) target = $region9
    $region8: #{tpu_custom_call.1} parent=1 // pred_region
      _
    $region9: #{tpu_custom_call.1} parent=1 // pred_fallthru
      _
    // Predicated region
    $region10: #{tpu_custom_call.1} parent=1 // pred_check
      _
    $region11: #{tpu_custom_call.1} parent=1 // pred_check_branch
      %20 = sbr.rel (0) target = $region13
    $region12: #{tpu_custom_call.1} parent=1 // pred_region
      _
    $region13: #{tpu_custom_call.1} parent=1 // pred_fallthru
      _
    // Predicated region
    $region14: #{tpu_custom_call.1} parent=1 // pred_check
      _
    $region15: #{tpu_custom_call.1} parent=1 // pred_check_branch
      %22 = sbr.rel (0) target = $region17
    $region16: #{tpu_custom_call.1} parent=1 // pred_region
      _
    $region17: #{tpu_custom_call.1} parent=1 // pred_fallthru
      _
    // Predicated region
    $region18: #{tpu_custom_call.1} parent=1 // pred_check
      _
    $region19: #{tpu_custom_call.1} parent=1 // pred_check_branch
      %24 = sbr.rel (0) target = $region21
    $region20: #{tpu_custom_call.1} parent=1 // pred_region
      _
    $region21: #{tpu_custom_call.1} parent=1 // pred_fallthru
      _
    // Predicated region
    $region22: #{tpu_custom_call.1} parent=1 // pred_check
      _
    $region23: #{tpu_custom_call.1} parent=1 // pred_check_branch
      %26 = sbr.rel (0) target = $region25
    $region24: #{tpu_custom_call.1} parent=1 // pred_region
      _
    $region25: #{tpu_custom_call.1} parent=1 // pred_fallthru
      _
    // Predicated region
    $region26: #{tpu_custom_call.1} parent=1 // pred_check
      _
    $region27: #{tpu_custom_call.1} parent=1 // pred_check_branch
      %28 = sbr.rel (0) target = $region29
    $region28: #{tpu_custom_call.1} parent=1 // pred_region
      _
    $region29: #{tpu_custom_call.1} parent=1 // pred_fallthru
      _
    // Predicated region
    $region30: #{tpu_custom_call.1} parent=1 // pred_check
      _
    $region31: #{tpu_custom_call.1} parent=1 // pred_check_branch
      %30 = sbr.rel (0) target = $region33
    $region32: #{tpu_custom_call.1} parent=1 // pred_region
      _
    $region33: #{tpu_custom_call.1} parent=1 // pred_fallthru
      _
    // Predicated region
    $region34: #{tpu_custom_call.1} parent=1 // pred_check
      _
    $region35: #{tpu_custom_call.1} parent=1 // pred_check_branch
      %32 = sbr.rel (0) target = $region37
    $region36: #{tpu_custom_call.1} parent=1 // pred_region
      _
    $region37: #{tpu_custom_call.1} parent=1 // pred_fallthru
      _
    %v33 = vld [vmem:[%s0] sm:$0xff]
    %v34 = vld [vmem:[%s0 + $0x8] sm:$0xff]
    %v35 = vld [vmem:[%s0 + $0x10] sm:$0xff]
    %v36 = vld [vmem:[%s0 + $0x18] sm:$0xff]
    %v37 = vld [vmem:[%s0 + $0x20] sm:$0xff]
    %v38 = vld [vmem:[%s0 + $0x28] sm:$0xff]
    %v39 = vld [vmem:[%s0 + $0x30] sm:$0xff]
    %v40 = vld [vmem:[%s0 + $0x38] sm:$0xff]
    %v41 = vld [vmem:[%s1] sm:$0xff]
    %v42 = vld [vmem:[%s1 + $0x8] sm:$0xff]
    %v43 = vld [vmem:[%s1 + $0x10] sm:$0xff]
    %v44 = vld [vmem:[%s1 + $0x18] sm:$0xff]
    %v45 = vld [vmem:[%s1 + $0x20] sm:$0xff]
    %v46 = vld [vmem:[%s1 + $0x28] sm:$0xff]
    %v47 = vld [vmem:[%s1 + $0x30] sm:$0xff]
    %v48 = vld [vmem:[%s1 + $0x38] sm:$0xff]
    %v49 = vld [vmem:[%s2] sm:$0xff]
    %v50 = vld [vmem:[%s3] sm:$0xff]
    %vm51 = vcmask 64512
    %v53 = vsel %vm51, %v41, 0
    %v56 = vsel %vm51, %v42, 0
    %v59 = vsel %vm51, %v43, 0
    %v62 = vsel %vm51, %v44, 0
    %v65 = vsel %vm51, %v45, 0
    %v68 = vsel %vm51, %v46, 0
    %v71 = vsel %vm51, %v47, 0
    %v74 = vsel %vm51, %v48, 0
    %76 = vmatprep.subr.mxu0 0.0
    %77 = vmatpush1.msra.mxu0 0.0
    %78 = vmatprep.subr.mxu0 0.0
    %79 = vmatpush1.msra.mxu0 0.0
    %80 = vmatprep.subr.mxu0 0.0
    %81 = vmatpush1.msra.mxu0 0.0
    %82 = vmatprep.subr.mxu0 0.0
    %83 = vmatpush1.msra.mxu0 0.0
    %84 = vmatprep.subr.mxu0 0.0
    %85 = vmatpush1.msra.mxu0 0.0
    %86 = vmatprep.subr.mxu0 0.0
    %87 = vmatpush1.msra.mxu0 0.0
    %88 = vmatprep.subr.mxu0 0.0
    %89 = vmatpush1.msra.mxu0 0.0
    %90 = vmatprep.subr.mxu0 0.0
    %91 = vmatpush1.msra.mxu0 0.0
    %92 = vmatprep.subr.mxu0 0.0
    %93 = vmatpush1.msra.mxu0 0.0
    %94 = vmatprep.subr.mxu0 0.0
    %95 = vmatpush1.msra.mxu0 0.0
    %96 = vmatprep.subr.mxu0 0.0
    %97 = vmatpush1.msra.mxu0 0.0
    %98 = vmatprep.subr.mxu0 0.0
    %99 = vmatpush1.msra.mxu0 0.0
    %100 = vmatprep.subr.mxu0 0.0
    %101 = vmatpush1.msra.mxu0 0.0
    %102 = vmatprep.subr.mxu0 0.0
    %103 = vmatpush1.msra.mxu0 0.0
    %104 = vmatprep.subr.mxu0 0.0
    %105 = vmatpush1.msra.mxu0 0.0
    %106 = vmatprep.subr.mxu0 0.0
    %107 = vmatpush1.msra.mxu0 %v50
    %108 = vmatprep.subr.mxu0 0.0
    %109 = vmatpush2.msra.mxu0 0.0
    %110 = vmatprep.subr.mxu0 0.0
    %111 = vmatpush2.msra.mxu0 0.0
    %112 = vmatprep.subr.mxu0 0.0
    %113 = vmatpush2.msra.mxu0 0.0
    %114 = vmatprep.subr.mxu0 0.0
    %115 = vmatpush2.msra.mxu0 0.0
    %116 = vmatprep.subr.mxu0 0.0
    %117 = vmatpush2.msra.mxu0 0.0
    %118 = vmatprep.subr.mxu0 0.0
    %119 = vmatpush2.msra.mxu0 0.0
    %120 = vmatprep.subr.mxu0 0.0
    %121 = vmatpush2.msra.mxu0 0.0
    %122 = vmatprep.subr.mxu0 0.0
    %123 = vmatpush2.msra.mxu0 0.0
    %124 = vmatprep.subr.mxu0 0.0
    %125 = vmatpush2.msra.mxu0 0.0
    %126 = vmatprep.subr.mxu0 0.0
    %127 = vmatpush2.msra.mxu0 0.0
    %128 = vmatprep.subr.mxu0 0.0
    %129 = vmatpush2.msra.mxu0 0.0
    %130 = vmatprep.subr.mxu0 0.0
    %131 = vmatpush2.msra.mxu0 0.0
    %132 = vmatprep.subr.mxu0 0.0
    %133 = vmatpush2.msra.mxu0 0.0
    %134 = vmatprep.subr.mxu0 0.0
    %135 = vmatpush2.msra.mxu0 0.0
    %136 = vmatprep.subr.mxu0 0.0
    %137 = vmatpush2.msra.mxu0 0.0
    %138 = vmatprep.subr.mxu0 0.0
    %139 = vmatpush2.msra.mxu0 0.0
    %140 = vmatprep.mubr.f32.mxu0 0.0
    %141 = vmatmul.mubr.f32.gmra.mxu0 %v53
    %v142 = vpop.f32.mrf.mxu0
    %v143 = vadd.f32 0.0, %v142
    %v144 = vpop.f32.mrf.mxu0
    %145 = vmatprep.mubr.f32.mxu0 0.0
    %146 = vmatmul.mubr.f32.gmra.mxu0 %v56
    %v147 = vpop.f32.mrf.mxu0
    %v148 = vadd.f32 0.0, %v147
    %v149 = vpop.f32.mrf.mxu0
    %150 = vmatprep.mubr.f32.mxu0 0.0
    %151 = vmatmul.mubr.f32.gmra.mxu0 %v59
    %v152 = vpop.f32.mrf.mxu0
    %v153 = vadd.f32 0.0, %v152
    %v154 = vpop.f32.mrf.mxu0
    %155 = vmatprep.mubr.f32.mxu0 0.0
    %156 = vmatmul.mubr.f32.gmra.mxu0 %v62
    %v157 = vpop.f32.mrf.mxu0
    %v158 = vadd.f32 0.0, %v157
    %v159 = vpop.f32.mrf.mxu0
    %160 = vmatprep.mubr.f32.mxu0 0.0
    %161 = vmatmul.mubr.f32.gmra.mxu0 %v65
    %v162 = vpop.f32.mrf.mxu0
    %v163 = vadd.f32 0.0, %v162
    %v164 = vpop.f32.mrf.mxu0
    %165 = vmatprep.mubr.f32.mxu0 0.0
    %166 = vmatmul.mubr.f32.gmra.mxu0 %v68
    %v167 = vpop.f32.mrf.mxu0
    %v168 = vadd.f32 0.0, %v167
    %v169 = vpop.f32.mrf.mxu0
    %170 = vmatprep.mubr.f32.mxu0 0.0
    %171 = vmatmul.mubr.f32.gmra.mxu0 %v71
    %v172 = vpop.f32.mrf.mxu0
    %v173 = vadd.f32 0.0, %v172
    %v174 = vpop.f32.mrf.mxu0
    %175 = vmatprep.mubr.f32.mxu0 0.0
    %176 = vmatmul.mubr.f32.gmra.mxu0 %v74
    %v177 = vpop.f32.mrf.mxu0
    %v178 = vadd.f32 0.0, %v177
    %v179 = vpop.f32.mrf.mxu0
    %180 = vdwg.mxu0
    %v182 = vsel %vm51, %v33, 0
    %v185 = vsel %vm51, %v34, 0
    %v188 = vsel %vm51, %v35, 0
    %v191 = vsel %vm51, %v36, 0
    %v194 = vsel %vm51, %v37, 0
    %v197 = vsel %vm51, %v38, 0
    %v200 = vsel %vm51, %v39, 0
    %v203 = vsel %vm51, %v40, 0
    %205 = vmatprep.subr.mxu0 0.0
    %206 = vmatpush1.msra.mxu0 0.0
    %207 = vmatprep.subr.mxu0 0.0
    %208 = vmatpush1.msra.mxu0 0.0
    %209 = vmatprep.subr.mxu0 0.0
    %210 = vmatpush1.msra.mxu0 0.0
    %211 = vmatprep.subr.mxu0 0.0
    %212 = vmatpush1.msra.mxu0 0.0
    %213 = vmatprep.subr.mxu0 0.0
    %214 = vmatpush1.msra.mxu0 0.0
    %215 = vmatprep.subr.mxu0 0.0
    %216 = vmatpush1.msra.mxu0 0.0
    %217 = vmatprep.subr.mxu0 0.0
    %218 = vmatpush1.msra.mxu0 0.0
    %219 = vmatprep.subr.mxu0 0.0
    %220 = vmatpush1.msra.mxu0 0.0
    %221 = vmatprep.subr.mxu0 0.0
    %222 = vmatpush1.msra.mxu0 0.0
    %223 = vmatprep.subr.mxu0 0.0
    %224 = vmatpush1.msra.mxu0 0.0
    %225 = vmatprep.subr.mxu0 0.0
    %226 = vmatpush1.msra.mxu0 0.0
    %227 = vmatprep.subr.mxu0 0.0
    %228 = vmatpush1.msra.mxu0 0.0
    %229 = vmatprep.subr.mxu0 0.0
    %230 = vmatpush1.msra.mxu0 0.0
    %231 = vmatprep.subr.mxu0 0.0
    %232 = vmatpush1.msra.mxu0 0.0
    %233 = vmatprep.subr.mxu0 0.0
    %234 = vmatpush1.msra.mxu0 0.0
    %235 = vmatprep.subr.mxu0 0.0
    %236 = vmatpush1.msra.mxu0 %v49
    %237 = vmatprep.subr.mxu0 0.0
    %238 = vmatpush2.msra.mxu0 0.0
    %239 = vmatprep.subr.mxu0 0.0
    %240 = vmatpush2.msra.mxu0 0.0
    %241 = vmatprep.subr.mxu0 0.0
    %242 = vmatpush2.msra.mxu0 0.0
    %243 = vmatprep.subr.mxu0 0.0
    %244 = vmatpush2.msra.mxu0 0.0
    %245 = vmatprep.subr.mxu0 0.0
    %246 = vmatpush2.msra.mxu0 0.0
    %247 = vmatprep.subr.mxu0 0.0
    %248 = vmatpush2.msra.mxu0 0.0
    %249 = vmatprep.subr.mxu0 0.0
    %250 = vmatpush2.msra.mxu0 0.0
    %251 = vmatprep.subr.mxu0 0.0
    %252 = vmatpush2.msra.mxu0 0.0
    %253 = vmatprep.subr.mxu0 0.0
    %254 = vmatpush2.msra.mxu0 0.0
    %255 = vmatprep.subr.mxu0 0.0
    %256 = vmatpush2.msra.mxu0 0.0
    %257 = vmatprep.subr.mxu0 0.0
    %258 = vmatpush2.msra.mxu0 0.0
    %259 = vmatprep.subr.mxu0 0.0
    %260 = vmatpush2.msra.mxu0 0.0
    %261 = vmatprep.subr.mxu0 0.0
    %262 = vmatpush2.msra.mxu0 0.0
    %263 = vmatprep.subr.mxu0 0.0
    %264 = vmatpush2.msra.mxu0 0.0
    %265 = vmatprep.subr.mxu0 0.0
    %266 = vmatpush2.msra.mxu0 0.0
    %267 = vmatprep.subr.mxu0 0.0
    %268 = vmatpush2.msra.mxu0 0.0
    %269 = vmatprep.mubr.f32.mxu0 0.0
    %270 = vmatmul.mubr.f32.gmra.mxu0 %v182
    %v271 = vpop.f32.mrf.mxu0
    %v272 = vadd.f32 %v143, %v271
    %v273 = vpop.f32.mrf.mxu0
    %274 = vmatprep.mubr.f32.mxu0 0.0
    %275 = vmatmul.mubr.f32.gmra.mxu0 %v185
    %v276 = vpop.f32.mrf.mxu0
    %v277 = vadd.f32 %v148, %v276
    %v278 = vpop.f32.mrf.mxu0
    %279 = vmatprep.mubr.f32.mxu0 0.0
    %280 = vmatmul.mubr.f32.gmra.mxu0 %v188
    %v281 = vpop.f32.mrf.mxu0
    %v282 = vadd.f32 %v153, %v281
    %v283 = vpop.f32.mrf.mxu0
    %284 = vmatprep.mubr.f32.mxu0 0.0
    %285 = vmatmul.mubr.f32.gmra.mxu0 %v191
    %v286 = vpop.f32.mrf.mxu0
    %v287 = vadd.f32 %v158, %v286
    %v288 = vpop.f32.mrf.mxu0
    %289 = vmatprep.mubr.f32.mxu0 0.0
    %290 = vmatmul.mubr.f32.gmra.mxu0 %v194
    %v291 = vpop.f32.mrf.mxu0
    %v292 = vadd.f32 %v163, %v291
    %v293 = vpop.f32.mrf.mxu0
    %294 = vmatprep.mubr.f32.mxu0 0.0
    %295 = vmatmul.mubr.f32.gmra.mxu0 %v197
    %v296 = vpop.f32.mrf.mxu0
    %v297 = vadd.f32 %v168, %v296
    %v298 = vpop.f32.mrf.mxu0
    %299 = vmatprep.mubr.f32.mxu0 0.0
    %300 = vmatmul.mubr.f32.gmra.mxu0 %v200
    %v301 = vpop.f32.mrf.mxu0
    %v302 = vadd.f32 %v173, %v301
    %v303 = vpop.f32.mrf.mxu0
    %304 = vmatprep.mubr.f32.mxu0 0.0
    %305 = vmatmul.mubr.f32.gmra.mxu0 %v203
    %v306 = vpop.f32.mrf.mxu0
    %v307 = vadd.f32 %v178, %v306
    %v308 = vpop.f32.mrf.mxu0
    %309 = vdwg.mxu0
    %v310 = vld [vmem:[%s4] sm:$0x1]
    %v312 = vlaneseq
    %v313 = vshrl.u32 %v312, 7
    %v314 = vsub.s32 0, %v313
    %v315 = vrot.slane %v310, %v314
    %v317 = vadd.f32 %v272, %v315
    %v318 = vadd.f32 %v277, %v315
    %v319 = vadd.f32 %v282, %v315
    %v320 = vadd.f32 %v287, %v315
    %v321 = vadd.f32 %v292, %v315
    %v322 = vadd.f32 %v297, %v315
    %v323 = vadd.f32 %v302, %v315
    %v324 = vadd.f32 %v307, %v315
    %v325 = vmax.f32 %v317, 0.0
    %v326 = vmax.f32 %v318, 0.0
    %v327 = vmax.f32 %v319, 0.0
    %v328 = vmax.f32 %v320, 0.0
    %v329 = vmax.f32 %v321, 0.0
    %v330 = vmax.f32 %v322, 0.0
    %v331 = vmax.f32 %v323, 0.0
    %v332 = vmax.f32 %v324, 0.0
    %v333 = vld [vmem:[%s5] sm:$0xff]
    %v334 = vld [vmem:[%s5 + $0x8] sm:$0xff]
    %v335 = vld [vmem:[%s5 + $0x10] sm:$0xff]
    %v336 = vld [vmem:[%s5 + $0x18] sm:$0xff]
    %v337 = vld [vmem:[%s6] sm:$0x1]
    %v339 = vlaneseq
    %v340 = vshrl.u32 %v339, 7
    %v341 = vsub.s32 0, %v340
    %v342 = vrot.slane %v337, %v341
    %vm344 = vcmask 261120
    %v346 = vsel %vm344, %v325, 0
    %v349 = vsel %vm344, %v326, 0
    %v352 = vsel %vm344, %v327, 0
    %v355 = vsel %vm344, %v328, 0
    %v358 = vsel %vm344, %v329, 0
    %v361 = vsel %vm344, %v330, 0
    %v364 = vsel %vm344, %v331, 0
    %v367 = vsel %vm344, %v332, 0
    %369 = vmatprep.subr.mxu0 0.0
    %370 = vmatpush1.msra.mxu0 0.0
    %371 = vmatprep.subr.mxu0 0.0
    %372 = vmatpush1.msra.mxu0 0.0
    %373 = vmatprep.subr.mxu0 0.0
    %374 = vmatpush1.msra.mxu0 0.0
    %375 = vmatprep.subr.mxu0 0.0
    %376 = vmatpush1.msra.mxu0 0.0
    %377 = vmatprep.subr.mxu0 0.0
    %378 = vmatpush1.msra.mxu0 0.0
    %379 = vmatprep.subr.mxu0 0.0
    %380 = vmatpush1.msra.mxu0 0.0
    %381 = vmatprep.subr.mxu0 0.0
    %382 = vmatpush1.msra.mxu0 0.0
    %383 = vmatprep.subr.mxu0 0.0
    %384 = vmatpush1.msra.mxu0 0.0
    %385 = vmatprep.subr.mxu0 0.0
    %386 = vmatpush1.msra.mxu0 0.0
    %387 = vmatprep.subr.mxu0 0.0
    %388 = vmatpush1.msra.mxu0 0.0
    %389 = vmatprep.subr.mxu0 0.0
    %390 = vmatpush1.msra.mxu0 0.0
    %391 = vmatprep.subr.mxu0 0.0
    %392 = vmatpush1.msra.mxu0 0.0
    %393 = vmatprep.subr.mxu0 0.0
    %394 = vmatpush1.msra.mxu0 %v336
    %395 = vmatprep.subr.mxu0 0.0
    %396 = vmatpush1.msra.mxu0 %v335
    %397 = vmatprep.subr.mxu0 0.0
    %398 = vmatpush1.msra.mxu0 %v334
    %399 = vmatprep.subr.mxu0 0.0
    %400 = vmatpush1.msra.mxu0 %v333
    %401 = vmatprep.subr.mxu0 0.0
    %402 = vmatpush2.msra.mxu0 0.0
    %403 = vmatprep.subr.mxu0 0.0
    %404 = vmatpush2.msra.mxu0 0.0
    %405 = vmatprep.subr.mxu0 0.0
    %406 = vmatpush2.msra.mxu0 0.0
    %407 = vmatprep.subr.mxu0 0.0
    %408 = vmatpush2.msra.mxu0 0.0
    %409 = vmatprep.subr.mxu0 0.0
    %410 = vmatpush2.msra.mxu0 0.0
    %411 = vmatprep.subr.mxu0 0.0
    %412 = vmatpush2.msra.mxu0 0.0
    %413 = vmatprep.subr.mxu0 0.0
    %414 = vmatpush2.msra.mxu0 0.0
    %415 = vmatprep.subr.mxu0 0.0
    %416 = vmatpush2.msra.mxu0 0.0
    %417 = vmatprep.subr.mxu0 0.0
    %418 = vmatpush2.msra.mxu0 0.0
    %419 = vmatprep.subr.mxu0 0.0
    %420 = vmatpush2.msra.mxu0 0.0
    %421 = vmatprep.subr.mxu0 0.0
    %422 = vmatpush2.msra.mxu0 0.0
    %423 = vmatprep.subr.mxu0 0.0
    %424 = vmatpush2.msra.mxu0 0.0
    %425 = vmatprep.subr.mxu0 0.0
    %426 = vmatpush2.msra.mxu0 0.0
    %427 = vmatprep.subr.mxu0 0.0
    %428 = vmatpush2.msra.mxu0 0.0
    %429 = vmatprep.subr.mxu0 0.0
    %430 = vmatpush2.msra.mxu0 0.0
    %431 = vmatprep.subr.mxu0 0.0
    %432 = vmatpush2.msra.mxu0 0.0
    %433 = vmatprep.mubr.f32.mxu0 0.0
    %434 = vmatmul.mubr.f32.gmra.mxu0 %v346
    %v435 = vpop.f32.mrf.mxu0
    %v436 = vadd.f32 %v342, %v435
    %v437 = vpop.f32.mrf.mxu0
    %438 = vmatprep.mubr.f32.mxu0 0.0
    %439 = vmatmul.mubr.f32.gmra.mxu0 %v349
    %v440 = vpop.f32.mrf.mxu0
    %v441 = vadd.f32 %v342, %v440
    %v442 = vpop.f32.mrf.mxu0
    %443 = vmatprep.mubr.f32.mxu0 0.0
    %444 = vmatmul.mubr.f32.gmra.mxu0 %v352
    %v445 = vpop.f32.mrf.mxu0
    %v446 = vadd.f32 %v342, %v445
    %v447 = vpop.f32.mrf.mxu0
    %448 = vmatprep.mubr.f32.mxu0 0.0
    %449 = vmatmul.mubr.f32.gmra.mxu0 %v355
    %v450 = vpop.f32.mrf.mxu0
    %v451 = vadd.f32 %v342, %v450
    %v452 = vpop.f32.mrf.mxu0
    %453 = vmatprep.mubr.f32.mxu0 0.0
    %454 = vmatmul.mubr.f32.gmra.mxu0 %v358
    %v455 = vpop.f32.mrf.mxu0
    %v456 = vadd.f32 %v342, %v455
    %v457 = vpop.f32.mrf.mxu0
    %458 = vmatprep.mubr.f32.mxu0 0.0
    %459 = vmatmul.mubr.f32.gmra.mxu0 %v361
    %v460 = vpop.f32.mrf.mxu0
    %v461 = vadd.f32 %v342, %v460
    %v462 = vpop.f32.mrf.mxu0
    %463 = vmatprep.mubr.f32.mxu0 0.0
    %464 = vmatmul.mubr.f32.gmra.mxu0 %v364
    %v465 = vpop.f32.mrf.mxu0
    %v466 = vadd.f32 %v342, %v465
    %v467 = vpop.f32.mrf.mxu0
    %468 = vmatprep.mubr.f32.mxu0 0.0
    %469 = vmatmul.mubr.f32.gmra.mxu0 %v367
    %v470 = vpop.f32.mrf.mxu0
    %v471 = vadd.f32 %v342, %v470
    %v472 = vpop.f32.mrf.mxu0
    %473 = vdwg.mxu0
    %v474 = vmax.f32 %v436, 0.0
    %v475 = vmax.f32 %v441, 0.0
    %v476 = vmax.f32 %v446, 0.0
    %v477 = vmax.f32 %v451, 0.0
    %v478 = vmax.f32 %v456, 0.0
    %v479 = vmax.f32 %v461, 0.0
    %v480 = vmax.f32 %v466, 0.0
    %v481 = vmax.f32 %v471, 0.0
    %v482 = vld [vmem:[%s7] sm:$0xff]
    %v483 = vld [vmem:[%s7 + $0x8] sm:$0xff]
    %v484 = vld [vmem:[%s7 + $0x10] sm:$0xff]
    %v485 = vld [vmem:[%s7 + $0x18] sm:$0xff]
    %v486 = vld [vmem:[%s8] sm:$0x1]
    %v488 = vlaneseq
    %v489 = vshrl.u32 %v488, 7
    %v490 = vsub.s32 0, %v489
    %v491 = vrot.slane %v486, %v490
    %v494 = vsel %vm344, %v474, 0
    %v497 = vsel %vm344, %v475, 0
    %v500 = vsel %vm344, %v476, 0
    %v503 = vsel %vm344, %v477, 0
    %v506 = vsel %vm344, %v478, 0
    %v509 = vsel %vm344, %v479, 0
    %v512 = vsel %vm344, %v480, 0
    %v515 = vsel %vm344, %v481, 0
    %517 = vmatprep.subr.mxu0 0.0
    %518 = vmatpush1.msra.mxu0 0.0
    %519 = vmatprep.subr.mxu0 0.0
    %520 = vmatpush1.msra.mxu0 0.0
    %521 = vmatprep.subr.mxu0 0.0
    %522 = vmatpush1.msra.mxu0 0.0
    %523 = vmatprep.subr.mxu0 0.0
    %524 = vmatpush1.msra.mxu0 0.0
    %525 = vmatprep.subr.mxu0 0.0
    %526 = vmatpush1.msra.mxu0 0.0
    %527 = vmatprep.subr.mxu0 0.0
    %528 = vmatpush1.msra.mxu0 0.0
    %529 = vmatprep.subr.mxu0 0.0
    %530 = vmatpush1.msra.mxu0 0.0
    %531 = vmatprep.subr.mxu0 0.0
    %532 = vmatpush1.msra.mxu0 0.0
    %533 = vmatprep.subr.mxu0 0.0
    %534 = vmatpush1.msra.mxu0 0.0
    %535 = vmatprep.subr.mxu0 0.0
    %536 = vmatpush1.msra.mxu0 0.0
    %537 = vmatprep.subr.mxu0 0.0
    %538 = vmatpush1.msra.mxu0 0.0
    %539 = vmatprep.subr.mxu0 0.0
    %540 = vmatpush1.msra.mxu0 0.0
    %541 = vmatprep.subr.mxu0 0.0
    %542 = vmatpush1.msra.mxu0 %v485
    %543 = vmatprep.subr.mxu0 0.0
    %544 = vmatpush1.msra.mxu0 %v484
    %545 = vmatprep.subr.mxu0 0.0
    %546 = vmatpush1.msra.mxu0 %v483
    %547 = vmatprep.subr.mxu0 0.0
    %548 = vmatpush1.msra.mxu0 %v482
    %549 = vmatprep.subr.mxu0 0.0
    %550 = vmatpush2.msra.mxu0 0.0
    %551 = vmatprep.subr.mxu0 0.0
    %552 = vmatpush2.msra.mxu0 0.0
    %553 = vmatprep.subr.mxu0 0.0
    %554 = vmatpush2.msra.mxu0 0.0
    %555 = vmatprep.subr.mxu0 0.0
    %556 = vmatpush2.msra.mxu0 0.0
    %557 = vmatprep.subr.mxu0 0.0
    %558 = vmatpush2.msra.mxu0 0.0
    %559 = vmatprep.subr.mxu0 0.0
    %560 = vmatpush2.msra.mxu0 0.0
    %561 = vmatprep.subr.mxu0 0.0
    %562 = vmatpush2.msra.mxu0 0.0
    %563 = vmatprep.subr.mxu0 0.0
    %564 = vmatpush2.msra.mxu0 0.0
    %565 = vmatprep.subr.mxu0 0.0
    %566 = vmatpush2.msra.mxu0 0.0
    %567 = vmatprep.subr.mxu0 0.0
    %568 = vmatpush2.msra.mxu0 0.0
    %569 = vmatprep.subr.mxu0 0.0
    %570 = vmatpush2.msra.mxu0 0.0
    %571 = vmatprep.subr.mxu0 0.0
    %572 = vmatpush2.msra.mxu0 0.0
    %573 = vmatprep.subr.mxu0 0.0
    %574 = vmatpush2.msra.mxu0 0.0
    %575 = vmatprep.subr.mxu0 0.0
    %576 = vmatpush2.msra.mxu0 0.0
    %577 = vmatprep.subr.mxu0 0.0
    %578 = vmatpush2.msra.mxu0 0.0
    %579 = vmatprep.subr.mxu0 0.0
    %580 = vmatpush2.msra.mxu0 0.0
    %581 = vmatprep.mubr.f32.mxu0 0.0
    %582 = vmatmul.mubr.f32.gmra.mxu0 %v494
    %v583 = vpop.f32.mrf.mxu0
    %v584 = vadd.f32 %v491, %v583
    %v585 = vpop.f32.mrf.mxu0
    %586 = vmatprep.mubr.f32.mxu0 0.0
    %587 = vmatmul.mubr.f32.gmra.mxu0 %v497
    %v588 = vpop.f32.mrf.mxu0
    %v589 = vadd.f32 %v491, %v588
    %v590 = vpop.f32.mrf.mxu0
    %591 = vmatprep.mubr.f32.mxu0 0.0
    %592 = vmatmul.mubr.f32.gmra.mxu0 %v500
    %v593 = vpop.f32.mrf.mxu0
    %v594 = vadd.f32 %v491, %v593
    %v595 = vpop.f32.mrf.mxu0
    %596 = vmatprep.mubr.f32.mxu0 0.0
    %597 = vmatmul.mubr.f32.gmra.mxu0 %v503
    %v598 = vpop.f32.mrf.mxu0
    %v599 = vadd.f32 %v491, %v598
    %v600 = vpop.f32.mrf.mxu0
    %601 = vmatprep.mubr.f32.mxu0 0.0
    %602 = vmatmul.mubr.f32.gmra.mxu0 %v506
    %v603 = vpop.f32.mrf.mxu0
    %v604 = vadd.f32 %v491, %v603
    %v605 = vpop.f32.mrf.mxu0
    %606 = vmatprep.mubr.f32.mxu0 0.0
    %607 = vmatmul.mubr.f32.gmra.mxu0 %v509
    %v608 = vpop.f32.mrf.mxu0
    %v609 = vadd.f32 %v491, %v608
    %v610 = vpop.f32.mrf.mxu0
    %611 = vmatprep.mubr.f32.mxu0 0.0
    %612 = vmatmul.mubr.f32.gmra.mxu0 %v512
    %v613 = vpop.f32.mrf.mxu0
    %v614 = vadd.f32 %v491, %v613
    %v615 = vpop.f32.mrf.mxu0
    %616 = vmatprep.mubr.f32.mxu0 0.0
    %617 = vmatmul.mubr.f32.gmra.mxu0 %v515
    %v618 = vpop.f32.mrf.mxu0
    %v619 = vadd.f32 %v491, %v618
    %v620 = vpop.f32.mrf.mxu0
    %621 = vdwg.mxu0
    %622 = vst [vmem:[#allocation2] sm:$0xff] %v584
    %623 = vst [vmem:[#allocation2 + $0x8] sm:$0xff] %v589
    %624 = vst [vmem:[#allocation2 + $0x10] sm:$0xff] %v594
    %625 = vst [vmem:[#allocation2 + $0x18] sm:$0xff] %v599
    %626 = vst [vmem:[#allocation2 + $0x20] sm:$0xff] %v604
    %627 = vst [vmem:[#allocation2 + $0x28] sm:$0xff] %v609
    %628 = vst [vmem:[#allocation2 + $0x30] sm:$0xff] %v614
    %629 = vst [vmem:[#allocation2 + $0x38] sm:$0xff] %v619
    // Predicated region
    $region38: #{tpu_custom_call.1} parent=1 // pred_check
      _
    $region39: #{tpu_custom_call.1} parent=1 // pred_check_branch
      %631 = sbr.rel (0) target = $region41
    $region40: #{tpu_custom_call.1} parent=1 // pred_region
      %s633 = ssub.s32 1024, 1024
      %634 = vsyncadd [#allocation3], %s633
      %s635 = sshll.u32 [#allocation2], 4
      %s636 = int_to_ptr.vmem [resolvable:$true] %s635
      %641 = dma.vmem_to_hbm [thread:$0]  %s636, 1024, %s9, [#allocation3], 128, 128, 8
    $region41: #{tpu_custom_call.1} parent=1 // pred_fallthru
      _
    // Predicated region
    $region42: #{tpu_custom_call.1} parent=1 // pred_check
      _
    $region43: #{tpu_custom_call.1} parent=1 // pred_check_branch
      %643 = sbr.rel (0) target = $region45
    $region44: #{tpu_custom_call.1} parent=1 // pred_region
      %644 = dma.done [#allocation3], 1024
    $region45: #{tpu_custom_call.1} parent=1 // pred_fallthru
      _
    %645 = vsyncpa [#allocation3], 1

// kernel: tpu_custom_call.1
$region0: #{tpu_custom_call.1}
  #allocation0 [shape = 'u32[]', space=smem, size = 0x4, offset = 0x4, fixed_abs, tag = 'smem constant byte address 0x4 - core index']
  #allocation1 [shape = 'u32[144,128]{1,0:T(1,128)}', space=vmem, size = 0x12000, scoped, tag = 'internal scratch']
  %s0 = inlined_call_operand.vmem [shape: f32[64,8], index: 0, kind: input, shape index: {}]
  %s1 = inlined_call_operand.vmem [shape: f32[64,8], index: 1, kind: input, shape index: {}]
  %s2 = inlined_call_operand.vmem [shape: f32[8,32], index: 2, kind: input, shape index: {}]
  %s3 = inlined_call_operand.vmem [shape: f32[8,32], index: 3, kind: input, shape index: {}]
  %s4 = inlined_call_operand.vmem [shape: f32[1,32], index: 4, kind: input, shape index: {}]
  %s5 = inlined_call_operand.vmem [shape: f32[32,32], index: 5, kind: input, shape index: {}]
  %s6 = inlined_call_operand.vmem [shape: f32[1,32], index: 6, kind: input, shape index: {}]
  %s7 = inlined_call_operand.vmem [shape: f32[32,128], index: 7, kind: input, shape index: {}]
  %s8 = inlined_call_operand.vmem [shape: f32[1,128], index: 8, kind: input, shape index: {}]
  %s9 = inlined_call_operand.hbm [shape: f32[64,128], index: 9, kind: output, shape index: {}]
  %s10 = sld [smem:[#allocation0]]
  $region46: #{tpu_custom_call.1} parent=0
    _
  %s12 = ssub.s32 1, %s10
  %s13 = scalar_select 0, %s12, %s10
  $region1: #{tpu_custom_call.1} parent=0
    #allocation2 [shape = 'u8[32768]{0}', space=vmem, size = 0x8000, scoped, tag = 'output window, operand 0, single buffered']
    #allocation3 [shape = 's32[1]{0}', space=sflag, size = 0x4, scoped, tag = 'scoped memory for tpu_custom_call.1']
    %14 = vsyncpa [#allocation3], 0
    // Predicated region
    $region2: #{tpu_custom_call.1} parent=1 // pred_check
      _
    $region3: #{tpu_custom_call.1} parent=1 // pred_check_branch
      %16 = sbr.rel (0) target = $region5
    $region4: #{tpu_custom_call.1} parent=1 // pred_region
      _
    $region5: #{tpu_custom_call.1} parent=1 // pred_fallthru
      _
    // Predicated region
    $region6: #{tpu_custom_call.1} parent=1 // pred_check
      _
    $region7: #{tpu_custom_call.1} parent=1 // pred_check_branch
      %18 = sbr.rel (0) target = $region9
    $region8: #{tpu_custom_call.1} parent=1 // pred_region
      _
    $region9: #{tpu_custom_call.1} parent=1 // pred_fallthru
      _
    // Predicated region
    $region10: #{tpu_custom_call.1} parent=1 // pred_check
      _
    $region11: #{tpu_custom_call.1} parent=1 // pred_check_branch
      %20 = sbr.rel (0) target = $region13
    $region12: #{tpu_custom_call.1} parent=1 // pred_region
      _
    $region13: #{tpu_custom_call.1} parent=1 // pred_fallthru
      _
    // Predicated region
    $region14: #{tpu_custom_call.1} parent=1 // pred_check
      _
    $region15: #{tpu_custom_call.1} parent=1 // pred_check_branch
      %22 = sbr.rel (0) target = $region17
    $region16: #{tpu_custom_call.1} parent=1 // pred_region
      _
    $region17: #{tpu_custom_call.1} parent=1 // pred_fallthru
      _
    // Predicated region
    $region18: #{tpu_custom_call.1} parent=1 // pred_check
      _
    $region19: #{tpu_custom_call.1} parent=1 // pred_check_branch
      %24 = sbr.rel (0) target = $region21
    $region20: #{tpu_custom_call.1} parent=1 // pred_region
      _
    $region21: #{tpu_custom_call.1} parent=1 // pred_fallthru
      _
    // Predicated region
    $region22: #{tpu_custom_call.1} parent=1 // pred_check
      _
    $region23: #{tpu_custom_call.1} parent=1 // pred_check_branch
      %26 = sbr.rel (0) target = $region25
    $region24: #{tpu_custom_call.1} parent=1 // pred_region
      _
    $region25: #{tpu_custom_call.1} parent=1 // pred_fallthru
      _
    // Predicated region
    $region26: #{tpu_custom_call.1} parent=1 // pred_check
      _
    $region27: #{tpu_custom_call.1} parent=1 // pred_check_branch
      %28 = sbr.rel (0) target = $region29
    $region28: #{tpu_custom_call.1} parent=1 // pred_region
      _
    $region29: #{tpu_custom_call.1} parent=1 // pred_fallthru
      _
    // Predicated region
    $region30: #{tpu_custom_call.1} parent=1 // pred_check
      _
    $region31: #{tpu_custom_call.1} parent=1 // pred_check_branch
      %30 = sbr.rel (0) target = $region33
    $region32: #{tpu_custom_call.1} parent=1 // pred_region
      _
    $region33: #{tpu_custom_call.1} parent=1 // pred_fallthru
      _
    // Predicated region
    $region34: #{tpu_custom_call.1} parent=1 // pred_check
      _
    $region35: #{tpu_custom_call.1} parent=1 // pred_check_branch
      %32 = sbr.rel (0) target = $region37
    $region36: #{tpu_custom_call.1} parent=1 // pred_region
      _
    $region37: #{tpu_custom_call.1} parent=1 // pred_fallthru
      _
    %v33 = vld [vmem:[%s0] sm:$0xff]
    %v34 = vld [vmem:[%s0 + $0x8] sm:$0xff]
    %v35 = vld [vmem:[%s0 + $0x10] sm:$0xff]
    %v36 = vld [vmem:[%s0 + $0x18] sm:$0xff]
    %v37 = vld [vmem:[%s0 + $0x20] sm:$0xff]
    %v38 = vld [vmem:[%s0 + $0x28] sm:$0xff]
    %v39 = vld [vmem:[%s0 + $0x30] sm:$0xff]
    %v40 = vld [vmem:[%s0 + $0x38] sm:$0xff]
    %v41 = vld [vmem:[%s1] sm:$0xff]
    %v42 = vld [vmem:[%s1 + $0x8] sm:$0xff]
    %v43 = vld [vmem:[%s1 + $0x10] sm:$0xff]
    %v44 = vld [vmem:[%s1 + $0x18] sm:$0xff]
    %v45 = vld [vmem:[%s1 + $0x20] sm:$0xff]
    %v46 = vld [vmem:[%s1 + $0x28] sm:$0xff]
    %v47 = vld [vmem:[%s1 + $0x30] sm:$0xff]
    %v48 = vld [vmem:[%s1 + $0x38] sm:$0xff]
    %v49 = vld [vmem:[%s2] sm:$0xff]
    %v50 = vld [vmem:[%s3] sm:$0xff]
    %vm51 = vcmask 64512
    %v53 = vsel %vm51, %v41, 0
    %v56 = vsel %vm51, %v42, 0
    %v59 = vsel %vm51, %v43, 0
    %v62 = vsel %vm51, %v44, 0
    %v65 = vsel %vm51, %v45, 0
    %v68 = vsel %vm51, %v46, 0
    %v71 = vsel %vm51, %v47, 0
    %v74 = vsel %vm51, %v48, 0
    %76 = vmatprep.subr.mxu0 0.0
    %77 = vmatpush1.msra.mxu0 0.0
    %78 = vmatprep.subr.mxu0 0.0
    %79 = vmatpush1.msra.mxu0 0.0
    %80 = vmatprep.subr.mxu0 0.0
    %81 = vmatpush1.msra.mxu0 0.0
    %82 = vmatprep.subr.mxu0 0.0
    %83 = vmatpush1.msra.mxu0 0.0
    %84 = vmatprep.subr.mxu0 0.0
    %85 = vmatpush1.msra.mxu0 0.0
    %86 = vmatprep.subr.mxu0 0.0
    %87 = vmatpush1.msra.mxu0 0.0
    %88 = vmatprep.subr.mxu0 0.0
    %89 = vmatpush1.msra.mxu0 0.0
    %90 = vmatprep.subr.mxu0 0.0
    %91 = vmatpush1.msra.mxu0 0.0
    %92 = vmatprep.subr.mxu0 0.0
    %93 = vmatpush1.msra.mxu0 0.0
    %94 = vmatprep.subr.mxu0 0.0
    %95 = vmatpush1.msra.mxu0 0.0
    %96 = vmatprep.subr.mxu0 0.0
    %97 = vmatpush1.msra.mxu0 0.0
    %98 = vmatprep.subr.mxu0 0.0
    %99 = vmatpush1.msra.mxu0 0.0
    %100 = vmatprep.subr.mxu0 0.0
    %101 = vmatpush1.msra.mxu0 0.0
    %102 = vmatprep.subr.mxu0 0.0
    %103 = vmatpush1.msra.mxu0 0.0
    %104 = vmatprep.subr.mxu0 0.0
    %105 = vmatpush1.msra.mxu0 0.0
    %106 = vmatprep.subr.mxu0 0.0
    %107 = vmatpush1.msra.mxu0 %v50
    %108 = vmatprep.subr.mxu0 0.0
    %109 = vmatpush2.msra.mxu0 0.0
    %110 = vmatprep.subr.mxu0 0.0
    %111 = vmatpush2.msra.mxu0 0.0
    %112 = vmatprep.subr.mxu0 0.0
    %113 = vmatpush2.msra.mxu0 0.0
    %114 = vmatprep.subr.mxu0 0.0
    %115 = vmatpush2.msra.mxu0 0.0
    %116 = vmatprep.subr.mxu0 0.0
    %117 = vmatpush2.msra.mxu0 0.0
    %118 = vmatprep.subr.mxu0 0.0
    %119 = vmatpush2.msra.mxu0 0.0
    %120 = vmatprep.subr.mxu0 0.0
    %121 = vmatpush2.msra.mxu0 0.0
    %122 = vmatprep.subr.mxu0 0.0
    %123 = vmatpush2.msra.mxu0 0.0
    %124 = vmatprep.subr.mxu0 0.0
    %125 = vmatpush2.msra.mxu0 0.0
    %126 = vmatprep.subr.mxu0 0.0
    %127 = vmatpush2.msra.mxu0 0.0
    %128 = vmatprep.subr.mxu0 0.0
    %129 = vmatpush2.msra.mxu0 0.0
    %130 = vmatprep.subr.mxu0 0.0
    %131 = vmatpush2.msra.mxu0 0.0
    %132 = vmatprep.subr.mxu0 0.0
    %133 = vmatpush2.msra.mxu0 0.0
    %134 = vmatprep.subr.mxu0 0.0
    %135 = vmatpush2.msra.mxu0 0.0
    %136 = vmatprep.subr.mxu0 0.0
    %137 = vmatpush2.msra.mxu0 0.0
    %138 = vmatprep.subr.mxu0 0.0
    %139 = vmatpush2.msra.mxu0 0.0
    %140 = vmatprep.mubr.f32.mxu0 0.0
    %141 = vmatmul.mubr.f32.gmra.mxu0 %v53
    %v142 = vpop.f32.mrf.mxu0
    %v143 = vadd.f32 0.0, %v142
    %v144 = vpop.f32.mrf.mxu0
    %145 = vmatprep.mubr.f32.mxu0 0.0
    %146 = vmatmul.mubr.f32.gmra.mxu0 %v56
    %v147 = vpop.f32.mrf.mxu0
    %v148 = vadd.f32 0.0, %v147
    %v149 = vpop.f32.mrf.mxu0
    %150 = vmatprep.mubr.f32.mxu0 0.0
    %151 = vmatmul.mubr.f32.gmra.mxu0 %v59
    %v152 = vpop.f32.mrf.mxu0
    %v153 = vadd.f32 0.0, %v152
    %v154 = vpop.f32.mrf.mxu0
    %155 = vmatprep.mubr.f32.mxu0 0.0
    %156 = vmatmul.mubr.f32.gmra.mxu0 %v62
    %v157 = vpop.f32.mrf.mxu0
    %v158 = vadd.f32 0.0, %v157
    %v159 = vpop.f32.mrf.mxu0
    %160 = vmatprep.mubr.f32.mxu0 0.0
    %161 = vmatmul.mubr.f32.gmra.mxu0 %v65
    %v162 = vpop.f32.mrf.mxu0
    %v163 = vadd.f32 0.0, %v162
    %v164 = vpop.f32.mrf.mxu0
    %165 = vmatprep.mubr.f32.mxu0 0.0
    %166 = vmatmul.mubr.f32.gmra.mxu0 %v68
    %v167 = vpop.f32.mrf.mxu0
    %v168 = vadd.f32 0.0, %v167
    %v169 = vpop.f32.mrf.mxu0
    %170 = vmatprep.mubr.f32.mxu0 0.0
    %171 = vmatmul.mubr.f32.gmra.mxu0 %v71
    %v172 = vpop.f32.mrf.mxu0
    %v173 = vadd.f32 0.0, %v172
    %v174 = vpop.f32.mrf.mxu0
    %175 = vmatprep.mubr.f32.mxu0 0.0
    %176 = vmatmul.mubr.f32.gmra.mxu0 %v74
    %v177 = vpop.f32.mrf.mxu0
    %v178 = vadd.f32 0.0, %v177
    %v179 = vpop.f32.mrf.mxu0
    %180 = vdwg.mxu0
    %v182 = vsel %vm51, %v33, 0
    %v185 = vsel %vm51, %v34, 0
    %v188 = vsel %vm51, %v35, 0
    %v191 = vsel %vm51, %v36, 0
    %v194 = vsel %vm51, %v37, 0
    %v197 = vsel %vm51, %v38, 0
    %v200 = vsel %vm51, %v39, 0
    %v203 = vsel %vm51, %v40, 0
    %205 = vmatprep.subr.mxu0 0.0
    %206 = vmatpush1.msra.mxu0 0.0
    %207 = vmatprep.subr.mxu0 0.0
    %208 = vmatpush1.msra.mxu0 0.0
    %209 = vmatprep.subr.mxu0 0.0
    %210 = vmatpush1.msra.mxu0 0.0
    %211 = vmatprep.subr.mxu0 0.0
    %212 = vmatpush1.msra.mxu0 0.0
    %213 = vmatprep.subr.mxu0 0.0
    %214 = vmatpush1.msra.mxu0 0.0
    %215 = vmatprep.subr.mxu0 0.0
    %216 = vmatpush1.msra.mxu0 0.0
    %217 = vmatprep.subr.mxu0 0.0
    %218 = vmatpush1.msra.mxu0 0.0
    %219 = vmatprep.subr.mxu0 0.0
    %220 = vmatpush1.msra.mxu0 0.0
    %221 = vmatprep.subr.mxu0 0.0
    %222 = vmatpush1.msra.mxu0 0.0
    %223 = vmatprep.subr.mxu0 0.0
    %224 = vmatpush1.msra.mxu0 0.0
    %225 = vmatprep.subr.mxu0 0.0
    %226 = vmatpush1.msra.mxu0 0.0
    %227 = vmatprep.subr.mxu0 0.0
    %228 = vmatpush1.msra.mxu0 0.0
    %229 = vmatprep.subr.mxu0 0.0
    %230 = vmatpush1.msra.mxu0 0.0
    %231 = vmatprep.subr.mxu0 0.0
    %232 = vmatpush1.msra.mxu0 0.0
    %233 = vmatprep.subr.mxu0 0.0
    %234 = vmatpush1.msra.mxu0 0.0
    %235 = vmatprep.subr.mxu0 0.0
    %236 = vmatpush1.msra.mxu0 %v49
    %237 = vmatprep.subr.mxu0 0.0
    %238 = vmatpush2.msra.mxu0 0.0
    %239 = vmatprep.subr.mxu0 0.0
    %240 = vmatpush2.msra.mxu0 0.0
    %241 = vmatprep.subr.mxu0 0.0
    %242 = vmatpush2.msra.mxu0 0.0
    %243 = vmatprep.subr.mxu0 0.0
    %244 = vmatpush2.msra.mxu0 0.0
    %245 = vmatprep.subr.mxu0 0.0
    %246 = vmatpush2.msra.mxu0 0.0
    %247 = vmatprep.subr.mxu0 0.0
    %248 = vmatpush2.msra.mxu0 0.0
    %249 = vmatprep.subr.mxu0 0.0
    %250 = vmatpush2.msra.mxu0 0.0
    %251 = vmatprep.subr.mxu0 0.0
    %252 = vmatpush2.msra.mxu0 0.0
    %253 = vmatprep.subr.mxu0 0.0
    %254 = vmatpush2.msra.mxu0 0.0
    %255 = vmatprep.subr.mxu0 0.0
    %256 = vmatpush2.msra.mxu0 0.0
    %257 = vmatprep.subr.mxu0 0.0
    %258 = vmatpush2.msra.mxu0 0.0
    %259 = vmatprep.subr.mxu0 0.0
    %260 = vmatpush2.msra.mxu0 0.0
    %261 = vmatprep.subr.mxu0 0.0
    %262 = vmatpush2.msra.mxu0 0.0
    %263 = vmatprep.subr.mxu0 0.0
    %264 = vmatpush2.msra.mxu0 0.0
    %265 = vmatprep.subr.mxu0 0.0
    %266 = vmatpush2.msra.mxu0 0.0
    %267 = vmatprep.subr.mxu0 0.0
    %268 = vmatpush2.msra.mxu0 0.0
    %269 = vmatprep.mubr.f32.mxu0 0.0
    %270 = vmatmul.mubr.f32.gmra.mxu0 %v182
    %v271 = vpop.f32.mrf.mxu0
    %v272 = vadd.f32 %v143, %v271
    %v273 = vpop.f32.mrf.mxu0
    %274 = vmatprep.mubr.f32.mxu0 0.0
    %275 = vmatmul.mubr.f32.gmra.mxu0 %v185
    %v276 = vpop.f32.mrf.mxu0
    %v277 = vadd.f32 %v148, %v276
    %v278 = vpop.f32.mrf.mxu0
    %279 = vmatprep.mubr.f32.mxu0 0.0
    %280 = vmatmul.mubr.f32.gmra.mxu0 %v188
    %v281 = vpop.f32.mrf.mxu0
    %v282 = vadd.f32 %v153, %v281
    %v283 = vpop.f32.mrf.mxu0
    %284 = vmatprep.mubr.f32.mxu0 0.0
    %285 = vmatmul.mubr.f32.gmra.mxu0 %v191
    %v286 = vpop.f32.mrf.mxu0
    %v287 = vadd.f32 %v158, %v286
    %v288 = vpop.f32.mrf.mxu0
    %289 = vmatprep.mubr.f32.mxu0 0.0
    %290 = vmatmul.mubr.f32.gmra.mxu0 %v194
    %v291 = vpop.f32.mrf.mxu0
    %v292 = vadd.f32 %v163, %v291
    %v293 = vpop.f32.mrf.mxu0
    %294 = vmatprep.mubr.f32.mxu0 0.0
    %295 = vmatmul.mubr.f32.gmra.mxu0 %v197
    %v296 = vpop.f32.mrf.mxu0
    %v297 = vadd.f32 %v168, %v296
    %v298 = vpop.f32.mrf.mxu0
    %299 = vmatprep.mubr.f32.mxu0 0.0
    %300 = vmatmul.mubr.f32.gmra.mxu0 %v200
    %v301 = vpop.f32.mrf.mxu0
    %v302 = vadd.f32 %v173, %v301
    %v303 = vpop.f32.mrf.mxu0
    %304 = vmatprep.mubr.f32.mxu0 0.0
    %305 = vmatmul.mubr.f32.gmra.mxu0 %v203
    %v306 = vpop.f32.mrf.mxu0
    %v307 = vadd.f32 %v178, %v306
    %v308 = vpop.f32.mrf.mxu0
    %309 = vdwg.mxu0
    %v310 = vld [vmem:[%s4] sm:$0x1]
    %v312 = vlaneseq
    %v313 = vshrl.u32 %v312, 7
    %v314 = vsub.s32 0, %v313
    %v315 = vrot.slane %v310, %v314
    %v317 = vadd.f32 %v272, %v315
    %v318 = vadd.f32 %v277, %v315
    %v319 = vadd.f32 %v282, %v315
    %v320 = vadd.f32 %v287, %v315
    %v321 = vadd.f32 %v292, %v315
    %v322 = vadd.f32 %v297, %v315
    %v323 = vadd.f32 %v302, %v315
    %v324 = vadd.f32 %v307, %v315
    %v325 = vmax.f32 %v317, 0.0
    %v326 = vmax.f32 %v318, 0.0
    %v327 = vmax.f32 %v319, 0.0
    %v328 = vmax.f32 %v320, 0.0
    %v329 = vmax.f32 %v321, 0.0
    %v330 = vmax.f32 %v322, 0.0
    %v331 = vmax.f32 %v323, 0.0
    %v332 = vmax.f32 %v324, 0.0
    %v333 = vld [vmem:[%s5] sm:$0xff]
    %v334 = vld [vmem:[%s5 + $0x8] sm:$0xff]
    %v335 = vld [vmem:[%s5 + $0x10] sm:$0xff]
    %v336 = vld [vmem:[%s5 + $0x18] sm:$0xff]
    %v337 = vld [vmem:[%s6] sm:$0x1]
    %v339 = vlaneseq
    %v340 = vshrl.u32 %v339, 7
    %v341 = vsub.s32 0, %v340
    %v342 = vrot.slane %v337, %v341
    %vm344 = vcmask 261120
    %v346 = vsel %vm344, %v325, 0
    %v349 = vsel %vm344, %v326, 0
    %v352 = vsel %vm344, %v327, 0
    %v355 = vsel %vm344, %v328, 0
    %v358 = vsel %vm344, %v329, 0
    %v361 = vsel %vm344, %v330, 0
    %v364 = vsel %vm344, %v331, 0
    %v367 = vsel %vm344, %v332, 0
    %369 = vmatprep.subr.mxu0 0.0
    %370 = vmatpush1.msra.mxu0 0.0
    %371 = vmatprep.subr.mxu0 0.0
    %372 = vmatpush1.msra.mxu0 0.0
    %373 = vmatprep.subr.mxu0 0.0
    %374 = vmatpush1.msra.mxu0 0.0
    %375 = vmatprep.subr.mxu0 0.0
    %376 = vmatpush1.msra.mxu0 0.0
    %377 = vmatprep.subr.mxu0 0.0
    %378 = vmatpush1.msra.mxu0 0.0
    %379 = vmatprep.subr.mxu0 0.0
    %380 = vmatpush1.msra.mxu0 0.0
    %381 = vmatprep.subr.mxu0 0.0
    %382 = vmatpush1.msra.mxu0 0.0
    %383 = vmatprep.subr.mxu0 0.0
    %384 = vmatpush1.msra.mxu0 0.0
    %385 = vmatprep.subr.mxu0 0.0
    %386 = vmatpush1.msra.mxu0 0.0
    %387 = vmatprep.subr.mxu0 0.0
    %388 = vmatpush1.msra.mxu0 0.0
    %389 = vmatprep.subr.mxu0 0.0
    %390 = vmatpush1.msra.mxu0 0.0
    %391 = vmatprep.subr.mxu0 0.0
    %392 = vmatpush1.msra.mxu0 0.0
    %393 = vmatprep.subr.mxu0 0.0
    %394 = vmatpush1.msra.mxu0 %v336
    %395 = vmatprep.subr.mxu0 0.0
    %396 = vmatpush1.msra.mxu0 %v335
    %397 = vmatprep.subr.mxu0 0.0
    %398 = vmatpush1.msra.mxu0 %v334
    %399 = vmatprep.subr.mxu0 0.0
    %400 = vmatpush1.msra.mxu0 %v333
    %401 = vmatprep.subr.mxu0 0.0
    %402 = vmatpush2.msra.mxu0 0.0
    %403 = vmatprep.subr.mxu0 0.0
    %404 = vmatpush2.msra.mxu0 0.0
    %405 = vmatprep.subr.mxu0 0.0
    %406 = vmatpush2.msra.mxu0 0.0
    %407 = vmatprep.subr.mxu0 0.0
    %408 = vmatpush2.msra.mxu0 0.0
    %409 = vmatprep.subr.mxu0 0.0
    %410 = vmatpush2.msra.mxu0 0.0
    %411 = vmatprep.subr.mxu0 0.0
    %412 = vmatpush2.msra.mxu0 0.0
    %413 = vmatprep.subr.mxu0 0.0
    %414 = vmatpush2.msra.mxu0 0.0
    %415 = vmatprep.subr.mxu0 0.0
    %416 = vmatpush2.msra.mxu0 0.0
    %417 = vmatprep.subr.mxu0 0.0
    %418 = vmatpush2.msra.mxu0 0.0
    %419 = vmatprep.subr.mxu0 0.0
    %420 = vmatpush2.msra.mxu0 0.0
    %421 = vmatprep.subr.mxu0 0.0
    %422 = vmatpush2.msra.mxu0 0.0
    %423 = vmatprep.subr.mxu0 0.0
    %424 = vmatpush2.msra.mxu0 0.0
    %425 = vmatprep.subr.mxu0 0.0
    %426 = vmatpush2.msra.mxu0 0.0
    %427 = vmatprep.subr.mxu0 0.0
    %428 = vmatpush2.msra.mxu0 0.0
    %429 = vmatprep.subr.mxu0 0.0
    %430 = vmatpush2.msra.mxu0 0.0
    %431 = vmatprep.subr.mxu0 0.0
    %432 = vmatpush2.msra.mxu0 0.0
    %433 = vmatprep.mubr.f32.mxu0 0.0
    %434 = vmatmul.mubr.f32.gmra.mxu0 %v346
    %v435 = vpop.f32.mrf.mxu0
    %v436 = vadd.f32 %v342, %v435
    %v437 = vpop.f32.mrf.mxu0
    %438 = vmatprep.mubr.f32.mxu0 0.0
    %439 = vmatmul.mubr.f32.gmra.mxu0 %v349
    %v440 = vpop.f32.mrf.mxu0
    %v441 = vadd.f32 %v342, %v440
    %v442 = vpop.f32.mrf.mxu0
    %443 = vmatprep.mubr.f32.mxu0 0.0
    %444 = vmatmul.mubr.f32.gmra.mxu0 %v352
    %v445 = vpop.f32.mrf.mxu0
    %v446 = vadd.f32 %v342, %v445
    %v447 = vpop.f32.mrf.mxu0
    %448 = vmatprep.mubr.f32.mxu0 0.0
    %449 = vmatmul.mubr.f32.gmra.mxu0 %v355
    %v450 = vpop.f32.mrf.mxu0
    %v451 = vadd.f32 %v342, %v450
    %v452 = vpop.f32.mrf.mxu0
    %453 = vmatprep.mubr.f32.mxu0 0.0
    %454 = vmatmul.mubr.f32.gmra.mxu0 %v358
    %v455 = vpop.f32.mrf.mxu0
    %v456 = vadd.f32 %v342, %v455
    %v457 = vpop.f32.mrf.mxu0
    %458 = vmatprep.mubr.f32.mxu0 0.0
    %459 = vmatmul.mubr.f32.gmra.mxu0 %v361
    %v460 = vpop.f32.mrf.mxu0
    %v461 = vadd.f32 %v342, %v460
    %v462 = vpop.f32.mrf.mxu0
    %463 = vmatprep.mubr.f32.mxu0 0.0
    %464 = vmatmul.mubr.f32.gmra.mxu0 %v364
    %v465 = vpop.f32.mrf.mxu0
    %v466 = vadd.f32 %v342, %v465
    %v467 = vpop.f32.mrf.mxu0
    %468 = vmatprep.mubr.f32.mxu0 0.0
    %469 = vmatmul.mubr.f32.gmra.mxu0 %v367
    %v470 = vpop.f32.mrf.mxu0
    %v471 = vadd.f32 %v342, %v470
    %v472 = vpop.f32.mrf.mxu0
    %473 = vdwg.mxu0
    %v474 = vmax.f32 %v436, 0.0
    %v475 = vmax.f32 %v441, 0.0
    %v476 = vmax.f32 %v446, 0.0
    %v477 = vmax.f32 %v451, 0.0
    %v478 = vmax.f32 %v456, 0.0
    %v479 = vmax.f32 %v461, 0.0
    %v480 = vmax.f32 %v466, 0.0
    %v481 = vmax.f32 %v471, 0.0
    %v482 = vld [vmem:[%s7] sm:$0xff]
    %v483 = vld [vmem:[%s7 + $0x8] sm:$0xff]
    %v484 = vld [vmem:[%s7 + $0x10] sm:$0xff]
    %v485 = vld [vmem:[%s7 + $0x18] sm:$0xff]
    %v486 = vld [vmem:[%s8] sm:$0x1]
    %v488 = vlaneseq
    %v489 = vshrl.u32 %v488, 7
    %v490 = vsub.s32 0, %v489
    %v491 = vrot.slane %v486, %v490
    %v494 = vsel %vm344, %v474, 0
    %v497 = vsel %vm344, %v475, 0
    %v500 = vsel %vm344, %v476, 0
    %v503 = vsel %vm344, %v477, 0
    %v506 = vsel %vm344, %v478, 0
    %v509 = vsel %vm344, %v479, 0
    %v512 = vsel %vm344, %v480, 0
    %v515 = vsel %vm344, %v481, 0
    %517 = vmatprep.subr.mxu0 0.0
    %518 = vmatpush1.msra.mxu0 0.0
    %519 = vmatprep.subr.mxu0 0.0
    %520 = vmatpush1.msra.mxu0 0.0
    %521 = vmatprep.subr.mxu0 0.0
    %522 = vmatpush1.msra.mxu0 0.0
    %523 = vmatprep.subr.mxu0 0.0
    %524 = vmatpush1.msra.mxu0 0.0
    %525 = vmatprep.subr.mxu0 0.0
    %526 = vmatpush1.msra.mxu0 0.0
    %527 = vmatprep.subr.mxu0 0.0
    %528 = vmatpush1.msra.mxu0 0.0
    %529 = vmatprep.subr.mxu0 0.0
    %530 = vmatpush1.msra.mxu0 0.0
    %531 = vmatprep.subr.mxu0 0.0
    %532 = vmatpush1.msra.mxu0 0.0
    %533 = vmatprep.subr.mxu0 0.0
    %534 = vmatpush1.msra.mxu0 0.0
    %535 = vmatprep.subr.mxu0 0.0
    %536 = vmatpush1.msra.mxu0 0.0
    %537 = vmatprep.subr.mxu0 0.0
    %538 = vmatpush1.msra.mxu0 0.0
    %539 = vmatprep.subr.mxu0 0.0
    %540 = vmatpush1.msra.mxu0 0.0
    %541 = vmatprep.subr.mxu0 0.0
    %542 = vmatpush1.msra.mxu0 %v485
    %543 = vmatprep.subr.mxu0 0.0
    %544 = vmatpush1.msra.mxu0 %v484
    %545 = vmatprep.subr.mxu0 0.0
    %546 = vmatpush1.msra.mxu0 %v483
    %547 = vmatprep.subr.mxu0 0.0
    %548 = vmatpush1.msra.mxu0 %v482
    %549 = vmatprep.subr.mxu0 0.0
    %550 = vmatpush2.msra.mxu0 0.0
    %551 = vmatprep.subr.mxu0 0.0
    %552 = vmatpush2.msra.mxu0 0.0
    %553 = vmatprep.subr.mxu0 0.0
    %554 = vmatpush2.msra.mxu0 0.0
    %555 = vmatprep.subr.mxu0 0.0
    %556 = vmatpush2.msra.mxu0 0.0
    %557 = vmatprep.subr.mxu0 0.0
    %558 = vmatpush2.msra.mxu0 0.0
    %559 = vmatprep.subr.mxu0 0.0
    %560 = vmatpush2.msra.mxu0 0.0
    %561 = vmatprep.subr.mxu0 0.0
    %562 = vmatpush2.msra.mxu0 0.0
    %563 = vmatprep.subr.mxu0 0.0
    %564 = vmatpush2.msra.mxu0 0.0
    %565 = vmatprep.subr.mxu0 0.0
    %566 = vmatpush2.msra.mxu0 0.0
    %567 = vmatprep.subr.mxu0 0.0
    %568 = vmatpush2.msra.mxu0 0.0
    %569 = vmatprep.subr.mxu0 0.0
    %570 = vmatpush2.msra.mxu0 0.0
    %571 = vmatprep.subr.mxu0 0.0
    %572 = vmatpush2.msra.mxu0 0.0
    %573 = vmatprep.subr.mxu0 0.0
    %574 = vmatpush2.msra.mxu0 0.0
    %575 = vmatprep.subr.mxu0 0.0
    %576 = vmatpush2.msra.mxu0 0.0
    %577 = vmatprep.subr.mxu0 0.0
    %578 = vmatpush2.msra.mxu0 0.0
    %579 = vmatprep.subr.mxu0 0.0
    %580 = vmatpush2.msra.mxu0 0.0
    %581 = vmatprep.mubr.f32.mxu0 0.0
    %582 = vmatmul.mubr.f32.gmra.mxu0 %v494
    %v583 = vpop.f32.mrf.mxu0
    %v584 = vadd.f32 %v491, %v583
    %v585 = vpop.f32.mrf.mxu0
    %586 = vmatprep.mubr.f32.mxu0 0.0
    %587 = vmatmul.mubr.f32.gmra.mxu0 %v497
    %v588 = vpop.f32.mrf.mxu0
    %v589 = vadd.f32 %v491, %v588
    %v590 = vpop.f32.mrf.mxu0
    %591 = vmatprep.mubr.f32.mxu0 0.0
    %592 = vmatmul.mubr.f32.gmra.mxu0 %v500
    %v593 = vpop.f32.mrf.mxu0
    %v594 = vadd.f32 %v491, %v593
    %v595 = vpop.f32.mrf.mxu0
    %596 = vmatprep.mubr.f32.mxu0 0.0
    %597 = vmatmul.mubr.f32.gmra.mxu0 %v503
    %v598 = vpop.f32.mrf.mxu0
    %v599 = vadd.f32 %v491, %v598
    %v600 = vpop.f32.mrf.mxu0
    %601 = vmatprep.mubr.f32.mxu0 0.0
    %602 = vmatmul.mubr.f32.gmra.mxu0 %v506
    %v603 = vpop.f32.mrf.mxu0
    %v604 = vadd.f32 %v491, %v603
    %v605 = vpop.f32.mrf.mxu0
    %606 = vmatprep.mubr.f32.mxu0 0.0
    %607 = vmatmul.mubr.f32.gmra.mxu0 %v509
    %v608 = vpop.f32.mrf.mxu0
    %v609 = vadd.f32 %v491, %v608
    %v610 = vpop.f32.mrf.mxu0
    %611 = vmatprep.mubr.f32.mxu0 0.0
    %612 = vmatmul.mubr.f32.gmra.mxu0 %v512
    %v613 = vpop.f32.mrf.mxu0
    %v614 = vadd.f32 %v491, %v613
    %v615 = vpop.f32.mrf.mxu0
    %616 = vmatprep.mubr.f32.mxu0 0.0
    %617 = vmatmul.mubr.f32.gmra.mxu0 %v515
    %v618 = vpop.f32.mrf.mxu0
    %v619 = vadd.f32 %v491, %v618
    %v620 = vpop.f32.mrf.mxu0
    %621 = vdwg.mxu0
    %622 = vst [vmem:[#allocation2] sm:$0xff] %v584
    %623 = vst [vmem:[#allocation2 + $0x8] sm:$0xff] %v589
    %624 = vst [vmem:[#allocation2 + $0x10] sm:$0xff] %v594
    %625 = vst [vmem:[#allocation2 + $0x18] sm:$0xff] %v599
    %626 = vst [vmem:[#allocation2 + $0x20] sm:$0xff] %v604
    %627 = vst [vmem:[#allocation2 + $0x28] sm:$0xff] %v609
    %628 = vst [vmem:[#allocation2 + $0x30] sm:$0xff] %v614
    %629 = vst [vmem:[#allocation2 + $0x38] sm:$0xff] %v619
    // Predicated region
    $region38: #{tpu_custom_call.1} parent=1 // pred_check
      _
    $region39: #{tpu_custom_call.1} parent=1 // pred_check_branch
      %631 = sbr.rel (0) target = $region41
    $region40: #{tpu_custom_call.1} parent=1 // pred_region
      %s633 = ssub.s32 1024, 1024
      %634 = vsyncadd [#allocation3], %s633
      %s635 = sshll.u32 [#allocation2], 4
      %s636 = int_to_ptr.vmem [resolvable:$true] %s635
      %641 = dma.vmem_to_hbm [thread:$0]  %s636, 1024, %s9, [#allocation3], 128, 128, 8
    $region41: #{tpu_custom_call.1} parent=1 // pred_fallthru
      _
    // Predicated region
    $region42: #{tpu_custom_call.1} parent=1 // pred_check
      _
    $region43: #{tpu_custom_call.1} parent=1 // pred_check_branch
      %643 = sbr.rel (0) target = $region45
    $region44: #{tpu_custom_call.1} parent=1 // pred_region
      %644 = dma.done [#allocation3], 1024
    $region45: #{tpu_custom_call.1} parent=1 // pred_fallthru
      _
    %645 = vsyncpa [#allocation3], 1

</llo_original>
